<compile_context>
chip_gen: v6e
topology: v6e:2x2x1
jax: 0.10.0
libtpu: 0.0.40
codegen_flags: <defaults>
</compile_context>

<pallas_src>
import numpy as np
import jax
import jax.numpy as jnp
from jax.experimental import pallas as pl

EMBED_DIM = 8
BN_EPS = 1e-6                 # matches partial(nn.BatchNorm2d, eps=1e-06) in the spec
E = EMBED_DIM                 # 8  : conv_stageN output channels
CMAX = EMBED_DIM * 8          # 64 : max stage channel count (stages are E,2E,4E,8E)
CIN_PAD = 8                   # pooled RGB (3 ch) zero-padded to 8 lanes for the MXU

# (kernel, stride, padding, output_padding, dilation) for deconv_stage1..4
DECONV_CFG = [
    (3, 4, 0, 1, 1),
    (3, 8, 0, 3, 2),
    (5, 16, 0, 3, 3),
    (7, 32, 1, 3, 5),
]


# ----------------------------------------------------------------------------
# Pallas kernel: fused (backbone-proj + FCU + BN folded) + ReLU
#                -> conv_stageN + ReLU
#                -> deconv channel reduction (scatter + last_conv folded in wd)
# Single invocation (no grid); every operand is a whole-array VMEM resident;
# the four stages are statically unrolled and write natural-shape outputs.
# ----------------------------------------------------------------------------
def _fused_kernel(x1, x2, x3, x4, w1, b1, w2, b2, wd1, wd2, wd3, wd4,
                  o1, o2, o3, o4):
    xs = (x1, x2, x3, x4)
    wds = (wd1, wd2, wd3, wd4)
    outs = (o1, o2, o3, o4)
    for i in range(4):                                      # statically unrolled
        x = xs[i][...]                                      # (P_i, 8) bf16
        # FCU 1x1 conv (backbone projection + BatchNorm folded in) + ReLU
        y = jnp.dot(x, w1[i], preferred_element_type=jnp.float32) + b1[i]
        y = jnp.maximum(y, 0.0)                             # (P_i, 64) f32
        # conv_stageN 1x1 + ReLU
        z = jnp.dot(y.astype(jnp.bfloat16), w2[i],
                    preferred_element_type=jnp.float32) + b2[i]
        z = jnp.maximum(z, 0.0)                             # (P_i, 8) f32
        # deconv: (P_i, 8) @ (8, stride^2) -> natural-shape lane block
        outs[i][...] = jnp.dot(z.astype(jnp.bfloat16), wds[i][...],
                               preferred_element_type=jnp.float32)


def fused_stages(xrows, params):
    """Run all four stages in ONE grid-less pallas_call; outputs keep their
    natural (P_i, stride_i^2) shapes so HBM writeback == useful bytes."""
    out_shapes = tuple(
        jax.ShapeDtypeStruct((r.shape[0], s * s), jnp.float32)
        for r, (_, s, _, _, _) in zip(xrows, DECONV_CFG))

    flops, bytes_acc = 0, 0
    for r, (_, s, _, _, _) in zip(xrows, DECONV_CFG):
        P = r.shape[0]
        flops += 2 * P * (CIN_PAD * CMAX + CMAX * E + E * s * s)
        bytes_acc += P * CIN_PAD * 2 + P * s * s * 4        # bf16 in, f32 out
    for w in (params["W1"], params["B1"], params["W2"], params["B2"],
              *params["WD"]):
        bytes_acc += int(w.size) * np.dtype(w.dtype).itemsize

    return pl.pallas_call(
        _fused_kernel,
        out_shape=out_shapes,
        cost_estimate=pl.CostEstimate(flops=int(flops), transcendentals=0,
                                      bytes_accessed=int(bytes_acc)),
    )(*xrows, params["W1"], params["B1"], params["W2"], params["B2"],
      *params["WD"])


# ----------------------------------------------------------------------------
# Parameters (deterministic synthetic init) with all algebraic folds applied.
# ----------------------------------------------------------------------------
def init_params(key, embed_dim):
    scalars = [1, 2, 4, 8]
    keys = iter(jax.random.split(key, 64))
    w1bns, b1bns, w2s, b2s, wds, bds = [], [], [], [], [], []
    for mult, (k, stride, pad, opad, dil) in zip(scalars, DECONV_CFG):
        C = embed_dim * mult
        w1 = 0.1 * jax.random.normal(next(keys), (C, C), jnp.float32)
        b1 = 0.1 * jax.random.normal(next(keys), (C,), jnp.float32)
        gamma = 1.0 + 0.1 * jax.random.normal(next(keys), (C,), jnp.float32)
        beta = 0.1 * jax.random.normal(next(keys), (C,), jnp.float32)
        rmean = 0.1 * jax.random.normal(next(keys), (C,), jnp.float32)
        rvar = 0.5 + jax.random.uniform(next(keys), (C,), jnp.float32)
        scale = gamma / jnp.sqrt(rvar + BN_EPS)
        shift = beta - rmean * scale
        # Fold eval-mode BatchNorm into the FCU 1x1 conv (exact).
        w1bns.append(w1 * scale[None, :])
        b1bns.append(b1 * scale + shift)
        w2s.append(0.1 * jax.random.normal(next(keys), (C, embed_dim), jnp.float32))
        b2s.append(0.1 * jax.random.normal(next(keys), (embed_dim,), jnp.float32))
        wds.append(0.1 * jax.random.normal(next(keys), (embed_dim, k * k), jnp.float32))
        bds.append(0.1 * jax.random.normal(next(keys), (), jnp.float32))

    # TODO(synk): the real RGBDInModule backbone (external ConFormer-style net
    # returning stages [1, 5, 37, 40]) has no definition in the module; it is
    # replaced by a deterministic avg-pool + 1x1 projection stand-in producing
    # the same stage shapes (E, 2E, 4E, 8E channels at /4, /8, /16, /32).
    projs = [0.2 * jax.random.normal(next(keys), (embed_dim * m, 3), jnp.float32)
             for m in scalars]
    w_last = 0.1 * jax.random.normal(next(keys), (4,), jnp.float32)
    b_last = 0.1 * jax.random.normal(next(keys), (), jnp.float32)

    # --- padded / folded operand stacks for the single fused kernel ---
    W1 = jnp.zeros((4, CIN_PAD, CMAX), jnp.float32)
    B1 = jnp.zeros((4, 1, CMAX), jnp.float32)
    W2 = jnp.zeros((4, CMAX, E), jnp.float32)
    B2 = jnp.zeros((4, 1, E), jnp.float32)
    WD = []
    for i, (mult, (k, stride, pad, opad, dil)) in enumerate(zip(scalars, DECONV_CFG)):
        C = embed_dim * mult
        # Fold the stand-in backbone 1x1 projection (3->C) into the FCU conv:
        # two consecutive linear maps compose exactly, so the kernel can take
        # pooled-RGB rows directly.
        w1_eff = projs[i].T @ w1bns[i]                           # (3, C)
        W1 = W1.at[i, :3, :C].set(w1_eff)
        B1 = B1.at[i, 0, :C].set(b1bns[i])
        W2 = W2.at[i, :C, :].set(w2s[i])
        B2 = B2.at[i, 0, :].set(b2s[i])
        # Fold the transposed-conv zero-scatter into wd (exact only because
        # stride >= dilation*(k-1)+1, i.e. taps of one pixel never overlap taps
        # of its neighbours), pre-scaled by the folded last_conv weight.
        assert stride >= dil * (k - 1) + 1, "overlapping deconv not supported"
        S = np.zeros((k * k, stride * stride), np.float32)
        for kh in range(k):
            for kw in range(k):
                S[kh * k + kw, (dil * kh) * stride + (dil * kw)] = 1.0
        wd_eff = w_last[i] * (wds[i] @ jnp.asarray(S))           # (E, stride^2)
        WD.append(wd_eff.astype(jnp.bfloat16))

    # All biases after the stage ReLU are linear -> collapse to one scalar.
    b_total = jnp.sum(w_last * jnp.stack(bds)) + b_last

    return dict(W1=W1.astype(jnp.bfloat16), B1=B1,
                W2=W2.astype(jnp.bfloat16), B2=B2,
                WD=tuple(WD), b_total=b_total)


def pooled_rgb_rows(x):
    """Stand-in backbone front-end: /4../32 average pools of the RGB input,
    flattened to (P_i, 8) pixel rows (3 channels zero-padded to 8 lanes).
    The per-stage 1x1 projection is already folded into W1 (init_params)."""
    N, C, H, W = x.shape
    pools = [x.reshape(N, C, H // 4, 4, W // 4, 4).mean(axis=(3, 5))]
    for _ in range(3):
        n, c, h, w = pools[-1].shape
        pools.append(pools[-1].reshape(n, c, h // 2, 2, w // 2, 2).mean(axis=(3, 5)))
    rows = []
    for p in pools:
        n, c, h, w = p.shape
        r = jnp.transpose(p, (0, 2, 3, 1)).reshape(n * h * w, c)
        rows.append(jnp.pad(r, ((0, 0), (0, CIN_PAD - c))).astype(jnp.bfloat16))
    return rows


# ----------------------------------------------------------------------------
# Full forward (RGBD_incomplete.forward)
# ----------------------------------------------------------------------------
@jax.jit
def rgbd_incomplete_forward(x, params):
    N, _, H, W = x.shape
    xrows = pooled_rgb_rows(x)
    dense = fused_stages(xrows, params)

    # Zero-FLOP placement glue (XLA): each pixel's stride x stride cell is
    # already scattered inside the kernel output; drop it onto the canvas,
    # apply the ConvTranspose2d crop / output_padding, and sum (last_conv
    # already folded into the kernel weights / b_total).
    total = None
    for d, (k, stride, pad, opad, dil) in zip(dense, DECONV_CFG):
        Hin, Win = H // stride, W // stride      # pool factor == deconv stride
        m = d.reshape(N, Hin, Win, stride, stride)
        m = jnp.transpose(m, (0, 1, 3, 2, 4)).reshape(N, Hin * stride, Win * stride)
        hf = (Hin - 1) * stride + dil * (k - 1) + 1
        wf = (Win - 1) * stride + dil * (k - 1) + 1
        m = m[:, :hf, :wf]
        if pad > 0:
            m = m[:, pad:hf - pad, pad:wf - pad]
        if opad > 0:
            m = jnp.pad(m, ((0, 0), (0, opad), (0, opad)))
        total = m if total is None else total + m

    out = total + params["b_total"]
    return out[:, None, :, :]                    # NCHW (N, 1, H, W)


if __name__ == "__main__":
    key = jax.random.PRNGKey(0)
    k_param, k_input = jax.random.split(key)
    params = init_params(k_param, EMBED_DIM)

    # f_all: NCHW RGB-ish input; 64x64 so the /32 stage is non-degenerate.
    x = jax.random.normal(k_input, (2, 3, 64, 64), jnp.float32)

    out = rgbd_incomplete_forward(x, params)
    out = jax.block_until_ready(out)
    assert out.shape == (2, 1, 64, 64), out.shape
    assert out.dtype == jnp.float32
    assert bool(jnp.all(jnp.isfinite(out)))
    print("KERNEL_OK")
</pallas_src>

<mosaic_0001>
module attributes {stable_mosaic.version = 11 : i64} {
  func.func @_fused_kernel(%arg0: memref<512x8xbf16, #tpu.memory_space<vmem>>, %arg1: memref<128x8xbf16, #tpu.memory_space<vmem>>, %arg2: memref<32x8xbf16, #tpu.memory_space<vmem>>, %arg3: memref<8x8xbf16, #tpu.memory_space<vmem>>, %arg4: memref<4x8x64xbf16, #tpu.memory_space<vmem>>, %arg5: memref<4x1x64xf32, #tpu.memory_space<vmem>>, %arg6: memref<4x64x8xbf16, #tpu.memory_space<vmem>>, %arg7: memref<4x1x8xf32, #tpu.memory_space<vmem>>, %arg8: memref<8x16xbf16, #tpu.memory_space<vmem>>, %arg9: memref<8x64xbf16, #tpu.memory_space<vmem>>, %arg10: memref<8x256xbf16, #tpu.memory_space<vmem>>, %arg11: memref<8x1024xbf16, #tpu.memory_space<vmem>>, %arg12: memref<512x16xf32, #tpu.memory_space<vmem>>, %arg13: memref<128x64xf32, #tpu.memory_space<vmem>>, %arg14: memref<32x256xf32, #tpu.memory_space<vmem>>, %arg15: memref<8x1024xf32, #tpu.memory_space<vmem>>) attributes {dimension_semantics = [], scalar_prefetch = 0 : i64, scratch_operands = 0 : i64, tpu.core_type = #tpu.core_type<tc>} {
    %c0 = arith.constant 0 : index
    %c0_0 = arith.constant 0 : index
    %0 = vector.load %arg0[%c0, %c0_0] : memref<512x8xbf16, #tpu.memory_space<vmem>>, vector<512x8xbf16>
    %c0_1 = arith.constant 0 : index
    %c0_2 = arith.constant 0 : index
    %c0_3 = arith.constant 0 : index
    %1 = vector.load %arg4[%c0_1, %c0_2, %c0_3] : memref<4x8x64xbf16, #tpu.memory_space<vmem>>, vector<1x8x64xbf16>
    %2 = vector.shape_cast %1 : vector<1x8x64xbf16> to vector<8x64xbf16>
    %cst = arith.constant dense<0.000000e+00> : vector<512x64xf32>
    %3 = tpu.matmul %0, %2, %cst {dimension_numbers = #tpu.dot_dimension_numbers<[1], [0], [0], [1], [0, 0, 1, 1], [], []>} : vector<512x8xbf16>, vector<8x64xbf16>, vector<512x64xf32> -> vector<512x64xf32>
    %c0_4 = arith.constant 0 : index
    %c0_5 = arith.constant 0 : index
    %c0_6 = arith.constant 0 : index
    %4 = vector.load %arg5[%c0_4, %c0_5, %c0_6] : memref<4x1x64xf32, #tpu.memory_space<vmem>>, vector<1x1x64xf32>
    %5 = vector.shape_cast %4 : vector<1x1x64xf32> to vector<1x64xf32>
    %6 = vector.broadcast %5 : vector<1x64xf32> to vector<512x64xf32>
    %7 = arith.addf %3, %6 : vector<512x64xf32>
    %cst_7 = arith.constant 0.000000e+00 : f32
    %8 = vector.broadcast %cst_7 : f32 to vector<512x64xf32>
    %9 = arith.maximumf %7, %8 : vector<512x64xf32>
    %10 = arith.truncf %9 : vector<512x64xf32> to vector<512x64xbf16>
    %c0_8 = arith.constant 0 : index
    %c0_9 = arith.constant 0 : index
    %c0_10 = arith.constant 0 : index
    %11 = vector.load %arg6[%c0_8, %c0_9, %c0_10] : memref<4x64x8xbf16, #tpu.memory_space<vmem>>, vector<1x64x8xbf16>
    %12 = vector.shape_cast %11 : vector<1x64x8xbf16> to vector<64x8xbf16>
    %cst_11 = arith.constant dense<0.000000e+00> : vector<512x8xf32>
    %13 = tpu.matmul %10, %12, %cst_11 {dimension_numbers = #tpu.dot_dimension_numbers<[1], [0], [0], [1], [0, 0, 1, 1], [], []>} : vector<512x64xbf16>, vector<64x8xbf16>, vector<512x8xf32> -> vector<512x8xf32>
    %c0_12 = arith.constant 0 : index
    %c0_13 = arith.constant 0 : index
    %c0_14 = arith.constant 0 : index
    %14 = vector.load %arg7[%c0_12, %c0_13, %c0_14] : memref<4x1x8xf32, #tpu.memory_space<vmem>>, vector<1x1x8xf32>
    %15 = vector.shape_cast %14 : vector<1x1x8xf32> to vector<1x8xf32>
    %16 = vector.broadcast %15 : vector<1x8xf32> to vector<512x8xf32>
    %17 = arith.addf %13, %16 : vector<512x8xf32>
    %cst_15 = arith.constant 0.000000e+00 : f32
    %18 = vector.broadcast %cst_15 : f32 to vector<512x8xf32>
    %19 = arith.maximumf %17, %18 : vector<512x8xf32>
    %20 = arith.truncf %19 : vector<512x8xf32> to vector<512x8xbf16>
    %c0_16 = arith.constant 0 : index
    %c0_17 = arith.constant 0 : index
    %21 = vector.load %arg8[%c0_16, %c0_17] : memref<8x16xbf16, #tpu.memory_space<vmem>>, vector<8x16xbf16>
    %cst_18 = arith.constant dense<0.000000e+00> : vector<512x16xf32>
    %22 = tpu.matmul %20, %21, %cst_18 {dimension_numbers = #tpu.dot_dimension_numbers<[1], [0], [0], [1], [0, 0, 1, 1], [], []>} : vector<512x8xbf16>, vector<8x16xbf16>, vector<512x16xf32> -> vector<512x16xf32>
    %c0_19 = arith.constant 0 : index
    %c0_20 = arith.constant 0 : index
    %23 = vector.load %arg12[%c0_19, %c0_20] : memref<512x16xf32, #tpu.memory_space<vmem>>, vector<512x16xf32>
    tpu.vector_store %arg12[%c0_19, %c0_20], %22 {strides = array<i32>} : memref<512x16xf32, #tpu.memory_space<vmem>>, vector<512x16xf32>,
    %c0_21 = arith.constant 0 : index
    %c0_22 = arith.constant 0 : index
    %24 = vector.load %arg1[%c0_21, %c0_22] : memref<128x8xbf16, #tpu.memory_space<vmem>>, vector<128x8xbf16>
    %c1 = arith.constant 1 : index
    %c0_23 = arith.constant 0 : index
    %c0_24 = arith.constant 0 : index
    %25 = vector.load %arg4[%c1, %c0_23, %c0_24] : memref<4x8x64xbf16, #tpu.memory_space<vmem>>, vector<1x8x64xbf16>
    %26 = vector.shape_cast %25 : vector<1x8x64xbf16> to vector<8x64xbf16>
    %cst_25 = arith.constant dense<0.000000e+00> : vector<128x64xf32>
    %27 = tpu.matmul %24, %26, %cst_25 {dimension_numbers = #tpu.dot_dimension_numbers<[1], [0], [0], [1], [0, 0, 1, 1], [], []>} : vector<128x8xbf16>, vector<8x64xbf16>, vector<128x64xf32> -> vector<128x64xf32>
    %c1_26 = arith.constant 1 : index
    %c0_27 = arith.constant 0 : index
    %c0_28 = arith.constant 0 : index
    %28 = vector.load %arg5[%c1_26, %c0_27, %c0_28] : memref<4x1x64xf32, #tpu.memory_space<vmem>>, vector<1x1x64xf32>
    %29 = vector.shape_cast %28 : vector<1x1x64xf32> to vector<1x64xf32>
    %30 = vector.broadcast %29 : vector<1x64xf32> to vector<128x64xf32>
    %31 = arith.addf %27, %30 : vector<128x64xf32>
    %cst_29 = arith.constant 0.000000e+00 : f32
    %32 = vector.broadcast %cst_29 : f32 to vector<128x64xf32>
    %33 = arith.maximumf %31, %32 : vector<128x64xf32>
    %34 = arith.truncf %33 : vector<128x64xf32> to vector<128x64xbf16>
    %c1_30 = arith.constant 1 : index
    %c0_31 = arith.constant 0 : index
    %c0_32 = arith.constant 0 : index
    %35 = vector.load %arg6[%c1_30, %c0_31, %c0_32] : memref<4x64x8xbf16, #tpu.memory_space<vmem>>, vector<1x64x8xbf16>
    %36 = vector.shape_cast %35 : vector<1x64x8xbf16> to vector<64x8xbf16>
    %cst_33 = arith.constant dense<0.000000e+00> : vector<128x8xf32>
    %37 = tpu.matmul %34, %36, %cst_33 {dimension_numbers = #tpu.dot_dimension_numbers<[1], [0], [0], [1], [0, 0, 1, 1], [], []>} : vector<128x64xbf16>, vector<64x8xbf16>, vector<128x8xf32> -> vector<128x8xf32>
    %c1_34 = arith.constant 1 : index
    %c0_35 = arith.constant 0 : index
    %c0_36 = arith.constant 0 : index
    %38 = vector.load %arg7[%c1_34, %c0_35, %c0_36] : memref<4x1x8xf32, #tpu.memory_space<vmem>>, vector<1x1x8xf32>
    %39 = vector.shape_cast %38 : vector<1x1x8xf32> to vector<1x8xf32>
    %40 = vector.broadcast %39 : vector<1x8xf32> to vector<128x8xf32>
    %41 = arith.addf %37, %40 : vector<128x8xf32>
    %cst_37 = arith.constant 0.000000e+00 : f32
    %42 = vector.broadcast %cst_37 : f32 to vector<128x8xf32>
    %43 = arith.maximumf %41, %42 : vector<128x8xf32>
    %44 = arith.truncf %43 : vector<128x8xf32> to vector<128x8xbf16>
    %c0_38 = arith.constant 0 : index
    %c0_39 = arith.constant 0 : index
    %45 = vector.load %arg9[%c0_38, %c0_39] : memref<8x64xbf16, #tpu.memory_space<vmem>>, vector<8x64xbf16>
    %cst_40 = arith.constant dense<0.000000e+00> : vector<128x64xf32>
    %46 = tpu.matmul %44, %45, %cst_40 {dimension_numbers = #tpu.dot_dimension_numbers<[1], [0], [0], [1], [0, 0, 1, 1], [], []>} : vector<128x8xbf16>, vector<8x64xbf16>, vector<128x64xf32> -> vector<128x64xf32>
    %c0_41 = arith.constant 0 : index
    %c0_42 = arith.constant 0 : index
    %47 = vector.load %arg13[%c0_41, %c0_42] : memref<128x64xf32, #tpu.memory_space<vmem>>, vector<128x64xf32>
    tpu.vector_store %arg13[%c0_41, %c0_42], %46 {strides = array<i32>} : memref<128x64xf32, #tpu.memory_space<vmem>>, vector<128x64xf32>,
    %c0_43 = arith.constant 0 : index
    %c0_44 = arith.constant 0 : index
    %48 = vector.load %arg2[%c0_43, %c0_44] : memref<32x8xbf16, #tpu.memory_space<vmem>>, vector<32x8xbf16>
    %c2 = arith.constant 2 : index
    %c0_45 = arith.constant 0 : index
    %c0_46 = arith.constant 0 : index
    %49 = vector.load %arg4[%c2, %c0_45, %c0_46] : memref<4x8x64xbf16, #tpu.memory_space<vmem>>, vector<1x8x64xbf16>
    %50 = vector.shape_cast %49 : vector<1x8x64xbf16> to vector<8x64xbf16>
    %cst_47 = arith.constant dense<0.000000e+00> : vector<32x64xf32>
    %51 = tpu.matmul %48, %50, %cst_47 {dimension_numbers = #tpu.dot_dimension_numbers<[1], [0], [0], [1], [0, 0, 1, 1], [], []>} : vector<32x8xbf16>, vector<8x64xbf16>, vector<32x64xf32> -> vector<32x64xf32>
    %c2_48 = arith.constant 2 : index
    %c0_49 = arith.constant 0 : index
    %c0_50 = arith.constant 0 : index
    %52 = vector.load %arg5[%c2_48, %c0_49, %c0_50] : memref<4x1x64xf32, #tpu.memory_space<vmem>>, vector<1x1x64xf32>
    %53 = vector.shape_cast %52 : vector<1x1x64xf32> to vector<1x64xf32>
    %54 = vector.broadcast %53 : vector<1x64xf32> to vector<32x64xf32>
    %55 = arith.addf %51, %54 : vector<32x64xf32>
    %cst_51 = arith.constant 0.000000e+00 : f32
    %56 = vector.broadcast %cst_51 : f32 to vector<32x64xf32>
    %57 = arith.maximumf %55, %56 : vector<32x64xf32>
    %58 = arith.truncf %57 : vector<32x64xf32> to vector<32x64xbf16>
    %c2_52 = arith.constant 2 : index
    %c0_53 = arith.constant 0 : index
    %c0_54 = arith.constant 0 : index
    %59 = vector.load %arg6[%c2_52, %c0_53, %c0_54] : memref<4x64x8xbf16, #tpu.memory_space<vmem>>, vector<1x64x8xbf16>
    %60 = vector.shape_cast %59 : vector<1x64x8xbf16> to vector<64x8xbf16>
    %cst_55 = arith.constant dense<0.000000e+00> : vector<32x8xf32>
    %61 = tpu.matmul %58, %60, %cst_55 {dimension_numbers = #tpu.dot_dimension_numbers<[1], [0], [0], [1], [0, 0, 1, 1], [], []>} : vector<32x64xbf16>, vector<64x8xbf16>, vector<32x8xf32> -> vector<32x8xf32>
    %c2_56 = arith.constant 2 : index
    %c0_57 = arith.constant 0 : index
    %c0_58 = arith.constant 0 : index
    %62 = vector.load %arg7[%c2_56, %c0_57, %c0_58] : memref<4x1x8xf32, #tpu.memory_space<vmem>>, vector<1x1x8xf32>
    %63 = vector.shape_cast %62 : vector<1x1x8xf32> to vector<1x8xf32>
    %64 = vector.broadcast %63 : vector<1x8xf32> to vector<32x8xf32>
    %65 = arith.addf %61, %64 : vector<32x8xf32>
    %cst_59 = arith.constant 0.000000e+00 : f32
    %66 = vector.broadcast %cst_59 : f32 to vector<32x8xf32>
    %67 = arith.maximumf %65, %66 : vector<32x8xf32>
    %68 = arith.truncf %67 : vector<32x8xf32> to vector<32x8xbf16>
    %c0_60 = arith.constant 0 : index
    %c0_61 = arith.constant 0 : index
    %69 = vector.load %arg10[%c0_60, %c0_61] : memref<8x256xbf16, #tpu.memory_space<vmem>>, vector<8x256xbf16>
    %cst_62 = arith.constant dense<0.000000e+00> : vector<32x256xf32>
    %70 = tpu.matmul %68, %69, %cst_62 {dimension_numbers = #tpu.dot_dimension_numbers<[1], [0], [0], [1], [0, 0, 1, 1], [], []>} : vector<32x8xbf16>, vector<8x256xbf16>, vector<32x256xf32> -> vector<32x256xf32>
    %c0_63 = arith.constant 0 : index
    %c0_64 = arith.constant 0 : index
    %71 = vector.load %arg14[%c0_63, %c0_64] : memref<32x256xf32, #tpu.memory_space<vmem>>, vector<32x256xf32>
    tpu.vector_store %arg14[%c0_63, %c0_64], %70 {strides = array<i32>} : memref<32x256xf32, #tpu.memory_space<vmem>>, vector<32x256xf32>,
    %c0_65 = arith.constant 0 : index
    %c0_66 = arith.constant 0 : index
    %72 = vector.load %arg3[%c0_65, %c0_66] : memref<8x8xbf16, #tpu.memory_space<vmem>>, vector<8x8xbf16>
    %c3 = arith.constant 3 : index
    %c0_67 = arith.constant 0 : index
    %c0_68 = arith.constant 0 : index
    %73 = vector.load %arg4[%c3, %c0_67, %c0_68] : memref<4x8x64xbf16, #tpu.memory_space<vmem>>, vector<1x8x64xbf16>
    %74 = vector.shape_cast %73 : vector<1x8x64xbf16> to vector<8x64xbf16>
    %cst_69 = arith.constant dense<0.000000e+00> : vector<8x64xf32>
    %75 = tpu.matmul %72, %74, %cst_69 {dimension_numbers = #tpu.dot_dimension_numbers<[1], [0], [0], [1], [0, 0, 1, 1], [], []>} : vector<8x8xbf16>, vector<8x64xbf16>, vector<8x64xf32> -> vector<8x64xf32>
    %c3_70 = arith.constant 3 : index
    %c0_71 = arith.constant 0 : index
    %c0_72 = arith.constant 0 : index
    %76 = vector.load %arg5[%c3_70, %c0_71, %c0_72] : memref<4x1x64xf32, #tpu.memory_space<vmem>>, vector<1x1x64xf32>
    %77 = vector.shape_cast %76 : vector<1x1x64xf32> to vector<1x64xf32>
    %78 = vector.broadcast %77 : vector<1x64xf32> to vector<8x64xf32>
    %79 = arith.addf %75, %78 : vector<8x64xf32>
    %cst_73 = arith.constant 0.000000e+00 : f32
    %80 = vector.broadcast %cst_73 : f32 to vector<8x64xf32>
    %81 = arith.maximumf %79, %80 : vector<8x64xf32>
    %82 = arith.truncf %81 : vector<8x64xf32> to vector<8x64xbf16>
    %c3_74 = arith.constant 3 : index
    %c0_75 = arith.constant 0 : index
    %c0_76 = arith.constant 0 : index
    %83 = vector.load %arg6[%c3_74, %c0_75, %c0_76] : memref<4x64x8xbf16, #tpu.memory_space<vmem>>, vector<1x64x8xbf16>
    %84 = vector.shape_cast %83 : vector<1x64x8xbf16> to vector<64x8xbf16>
    %cst_77 = arith.constant dense<0.000000e+00> : vector<8x8xf32>
    %85 = tpu.matmul %82, %84, %cst_77 {dimension_numbers = #tpu.dot_dimension_numbers<[1], [0], [0], [1], [0, 0, 1, 1], [], []>} : vector<8x64xbf16>, vector<64x8xbf16>, vector<8x8xf32> -> vector<8x8xf32>
    %c3_78 = arith.constant 3 : index
    %c0_79 = arith.constant 0 : index
    %c0_80 = arith.constant 0 : index
    %86 = vector.load %arg7[%c3_78, %c0_79, %c0_80] : memref<4x1x8xf32, #tpu.memory_space<vmem>>, vector<1x1x8xf32>
    %87 = vector.shape_cast %86 : vector<1x1x8xf32> to vector<1x8xf32>
    %88 = vector.broadcast %87 : vector<1x8xf32> to vector<8x8xf32>
    %89 = arith.addf %85, %88 : vector<8x8xf32>
    %cst_81 = arith.constant 0.000000e+00 : f32
    %90 = vector.broadcast %cst_81 : f32 to vector<8x8xf32>
    %91 = arith.maximumf %89, %90 : vector<8x8xf32>
    %92 = arith.truncf %91 : vector<8x8xf32> to vector<8x8xbf16>
    %c0_82 = arith.constant 0 : index
    %c0_83 = arith.constant 0 : index
    %93 = vector.load %arg11[%c0_82, %c0_83] : memref<8x1024xbf16, #tpu.memory_space<vmem>>, vector<8x1024xbf16>
    %cst_84 = arith.constant dense<0.000000e+00> : vector<8x1024xf32>
    %94 = tpu.matmul %92, %93, %cst_84 {dimension_numbers = #tpu.dot_dimension_numbers<[1], [0], [0], [1], [0, 0, 1, 1], [], []>} : vector<8x8xbf16>, vector<8x1024xbf16>, vector<8x1024xf32> -> vector<8x1024xf32>
    %c0_85 = arith.constant 0 : index
    %c0_86 = arith.constant 0 : index
    %95 = vector.load %arg15[%c0_85, %c0_86] : memref<8x1024xf32, #tpu.memory_space<vmem>>, vector<8x1024xf32>
    tpu.vector_store %arg15[%c0_85, %c0_86], %94 {strides = array<i32>} : memref<8x1024xf32, #tpu.memory_space<vmem>>, vector<8x1024xf32>,
    return
  }
}

</mosaic_0001>

<llo_original>
// kernel: rgbd_incomplete_forward.1
$region0: #{rgbd_incomplete_forward.1}
  #allocation0 [shape = 'u32[]', space=smem, size = 0x4, offset = 0x4, fixed_abs, tag = 'smem constant byte address 0x4 - core index']
  #allocation1 [shape = 'u32[144,128]{1,0:T(1,128)}', space=vmem, size = 0x12000, scoped, tag = 'internal scratch']
  %s0 = inlined_call_operand.vmem [shape: bf16[512,8], index: 0, kind: input, shape index: {}]
  %s1 = inlined_call_operand.vmem [shape: bf16[128,8], index: 1, kind: input, shape index: {}]
  %s2 = inlined_call_operand.vmem [shape: bf16[32,8], index: 2, kind: input, shape index: {}]
  %s3 = inlined_call_operand.vmem [shape: bf16[8,8], index: 3, kind: input, shape index: {}]
  %s4 = inlined_call_operand.vmem [shape: bf16[4,8,64], index: 4, kind: input, shape index: {}]
  %s5 = inlined_call_operand.vmem [shape: f32[4,1,64], index: 5, kind: input, shape index: {}]
  %s6 = inlined_call_operand.vmem [shape: bf16[4,64,8], index: 6, kind: input, shape index: {}]
  %s7 = inlined_call_operand.vmem [shape: f32[4,1,8], index: 7, kind: input, shape index: {}]
  %s8 = inlined_call_operand.vmem [shape: bf16[8,16], index: 8, kind: input, shape index: {}]
  %s9 = inlined_call_operand.vmem [shape: bf16[8,64], index: 9, kind: input, shape index: {}]
  %s10 = inlined_call_operand.vmem [shape: bf16[8,256], index: 10, kind: input, shape index: {}]
  %s11 = inlined_call_operand.vmem [shape: bf16[8,1024], index: 11, kind: input, shape index: {}]
  %s12 = inlined_call_operand.vmem [shape: f32[512,16], index: 12, kind: output, shape index: {0}]
  %s13 = inlined_call_operand.vmem [shape: f32[128,64], index: 13, kind: output, shape index: {1}]
  %s14 = inlined_call_operand.vmem [shape: f32[32,256], index: 14, kind: output, shape index: {2}]
  %s15 = inlined_call_operand.vmem [shape: f32[8,1024], index: 15, kind: output, shape index: {3}]
  %16 = xla_tuple %s12, %s13, %s14, %s15
  %s17 = sld [smem:[#allocation0]]
  $region82: #{rgbd_incomplete_forward.1} parent=0
    _
  %s19 = ssub.s32 1, %s17
  %s20 = scalar_select 0, %s19, %s17
  // Predicated region
  $region2: #{rgbd_incomplete_forward.1} parent=0 // pred_check
    _
  $region3: #{rgbd_incomplete_forward.1} parent=0 // pred_check_branch
    %22 = sbr.rel (0) target = $region5
  $region4: #{rgbd_incomplete_forward.1} parent=0 // pred_region
    _
  $region5: #{rgbd_incomplete_forward.1} parent=0 // pred_fallthru
    _
  // Predicated region
  $region6: #{rgbd_incomplete_forward.1} parent=0 // pred_check
    _
  $region7: #{rgbd_incomplete_forward.1} parent=0 // pred_check_branch
    %24 = sbr.rel (0) target = $region9
  $region8: #{rgbd_incomplete_forward.1} parent=0 // pred_region
    _
  $region9: #{rgbd_incomplete_forward.1} parent=0 // pred_fallthru
    _
  // Predicated region
  $region10: #{rgbd_incomplete_forward.1} parent=0 // pred_check
    _
  $region11: #{rgbd_incomplete_forward.1} parent=0 // pred_check_branch
    %26 = sbr.rel (0) target = $region13
  $region12: #{rgbd_incomplete_forward.1} parent=0 // pred_region
    _
  $region13: #{rgbd_incomplete_forward.1} parent=0 // pred_fallthru
    _
  // Predicated region
  $region14: #{rgbd_incomplete_forward.1} parent=0 // pred_check
    _
  $region15: #{rgbd_incomplete_forward.1} parent=0 // pred_check_branch
    %28 = sbr.rel (0) target = $region17
  $region16: #{rgbd_incomplete_forward.1} parent=0 // pred_region
    _
  $region17: #{rgbd_incomplete_forward.1} parent=0 // pred_fallthru
    _
  // Predicated region
  $region18: #{rgbd_incomplete_forward.1} parent=0 // pred_check
    _
  $region19: #{rgbd_incomplete_forward.1} parent=0 // pred_check_branch
    %30 = sbr.rel (0) target = $region21
  $region20: #{rgbd_incomplete_forward.1} parent=0 // pred_region
    _
  $region21: #{rgbd_incomplete_forward.1} parent=0 // pred_fallthru
    _
  // Predicated region
  $region22: #{rgbd_incomplete_forward.1} parent=0 // pred_check
    _
  $region23: #{rgbd_incomplete_forward.1} parent=0 // pred_check_branch
    %32 = sbr.rel (0) target = $region25
  $region24: #{rgbd_incomplete_forward.1} parent=0 // pred_region
    _
  $region25: #{rgbd_incomplete_forward.1} parent=0 // pred_fallthru
    _
  // Predicated region
  $region26: #{rgbd_incomplete_forward.1} parent=0 // pred_check
    _
  $region27: #{rgbd_incomplete_forward.1} parent=0 // pred_check_branch
    %34 = sbr.rel (0) target = $region29
  $region28: #{rgbd_incomplete_forward.1} parent=0 // pred_region
    _
  $region29: #{rgbd_incomplete_forward.1} parent=0 // pred_fallthru
    _
  // Predicated region
  $region30: #{rgbd_incomplete_forward.1} parent=0 // pred_check
    _
  $region31: #{rgbd_incomplete_forward.1} parent=0 // pred_check_branch
    %36 = sbr.rel (0) target = $region33
  $region32: #{rgbd_incomplete_forward.1} parent=0 // pred_region
    _
  $region33: #{rgbd_incomplete_forward.1} parent=0 // pred_fallthru
    _
  // Predicated region
  $region34: #{rgbd_incomplete_forward.1} parent=0 // pred_check
    _
  $region35: #{rgbd_incomplete_forward.1} parent=0 // pred_check_branch
    %38 = sbr.rel (0) target = $region37
  $region36: #{rgbd_incomplete_forward.1} parent=0 // pred_region
    _
  $region37: #{rgbd_incomplete_forward.1} parent=0 // pred_fallthru
    _
  // Predicated region
  $region38: #{rgbd_incomplete_forward.1} parent=0 // pred_check
    _
  $region39: #{rgbd_incomplete_forward.1} parent=0 // pred_check_branch
    %40 = sbr.rel (0) target = $region41
  $region40: #{rgbd_incomplete_forward.1} parent=0 // pred_region
    _
  $region41: #{rgbd_incomplete_forward.1} parent=0 // pred_fallthru
    _
  // Predicated region
  $region42: #{rgbd_incomplete_forward.1} parent=0 // pred_check
    _
  $region43: #{rgbd_incomplete_forward.1} parent=0 // pred_check_branch
    %42 = sbr.rel (0) target = $region45
  $region44: #{rgbd_incomplete_forward.1} parent=0 // pred_region
    _
  $region45: #{rgbd_incomplete_forward.1} parent=0 // pred_fallthru
    _
  // Predicated region
  $region46: #{rgbd_incomplete_forward.1} parent=0 // pred_check
    _
  $region47: #{rgbd_incomplete_forward.1} parent=0 // pred_check_branch
    %44 = sbr.rel (0) target = $region49
  $region48: #{rgbd_incomplete_forward.1} parent=0 // pred_region
    _
  $region49: #{rgbd_incomplete_forward.1} parent=0 // pred_fallthru
    _
  %v46 = vld [vmem:[%s0] sm:$0xf]
  %v47 = vld [vmem:[%s0 + $0x4] sm:$0xf]
  %v48 = vld [vmem:[%s0 + $0x8] sm:$0xf]
  %v49 = vld [vmem:[%s0 + $0xc] sm:$0xf]
  %v50 = vld [vmem:[%s0 + $0x10] sm:$0xf]
  %v51 = vld [vmem:[%s0 + $0x14] sm:$0xf]
  %v52 = vld [vmem:[%s0 + $0x18] sm:$0xf]
  %v53 = vld [vmem:[%s0 + $0x1c] sm:$0xf]
  %v54 = vld [vmem:[%s0 + $0x20] sm:$0xf]
  %v55 = vld [vmem:[%s0 + $0x24] sm:$0xf]
  %v56 = vld [vmem:[%s0 + $0x28] sm:$0xf]
  %v57 = vld [vmem:[%s0 + $0x2c] sm:$0xf]
  %v58 = vld [vmem:[%s0 + $0x30] sm:$0xf]
  %v59 = vld [vmem:[%s0 + $0x34] sm:$0xf]
  %v60 = vld [vmem:[%s0 + $0x38] sm:$0xf]
  %v61 = vld [vmem:[%s0 + $0x3c] sm:$0xf]
  %v62 = vld [vmem:[%s0 + $0x40] sm:$0xf]
  %v63 = vld [vmem:[%s0 + $0x44] sm:$0xf]
  %v64 = vld [vmem:[%s0 + $0x48] sm:$0xf]
  %v65 = vld [vmem:[%s0 + $0x4c] sm:$0xf]
  %v66 = vld [vmem:[%s0 + $0x50] sm:$0xf]
  %v67 = vld [vmem:[%s0 + $0x54] sm:$0xf]
  %v68 = vld [vmem:[%s0 + $0x58] sm:$0xf]
  %v69 = vld [vmem:[%s0 + $0x5c] sm:$0xf]
  %v70 = vld [vmem:[%s0 + $0x60] sm:$0xf]
  %v71 = vld [vmem:[%s0 + $0x64] sm:$0xf]
  %v72 = vld [vmem:[%s0 + $0x68] sm:$0xf]
  %v73 = vld [vmem:[%s0 + $0x6c] sm:$0xf]
  %v74 = vld [vmem:[%s0 + $0x70] sm:$0xf]
  %v75 = vld [vmem:[%s0 + $0x74] sm:$0xf]
  %v76 = vld [vmem:[%s0 + $0x78] sm:$0xf]
  %v77 = vld [vmem:[%s0 + $0x7c] sm:$0xf]
  %v78 = vld [vmem:[%s0 + $0x80] sm:$0xf]
  %v79 = vld [vmem:[%s0 + $0x84] sm:$0xf]
  %v80 = vld [vmem:[%s0 + $0x88] sm:$0xf]
  %v81 = vld [vmem:[%s0 + $0x8c] sm:$0xf]
  %v82 = vld [vmem:[%s0 + $0x90] sm:$0xf]
  %v83 = vld [vmem:[%s0 + $0x94] sm:$0xf]
  %v84 = vld [vmem:[%s0 + $0x98] sm:$0xf]
  %v85 = vld [vmem:[%s0 + $0x9c] sm:$0xf]
  %v86 = vld [vmem:[%s0 + $0xa0] sm:$0xf]
  %v87 = vld [vmem:[%s0 + $0xa4] sm:$0xf]
  %v88 = vld [vmem:[%s0 + $0xa8] sm:$0xf]
  %v89 = vld [vmem:[%s0 + $0xac] sm:$0xf]
  %v90 = vld [vmem:[%s0 + $0xb0] sm:$0xf]
  %v91 = vld [vmem:[%s0 + $0xb4] sm:$0xf]
  %v92 = vld [vmem:[%s0 + $0xb8] sm:$0xf]
  %v93 = vld [vmem:[%s0 + $0xbc] sm:$0xf]
  %v94 = vld [vmem:[%s0 + $0xc0] sm:$0xf]
  %v95 = vld [vmem:[%s0 + $0xc4] sm:$0xf]
  %v96 = vld [vmem:[%s0 + $0xc8] sm:$0xf]
  %v97 = vld [vmem:[%s0 + $0xcc] sm:$0xf]
  %v98 = vld [vmem:[%s0 + $0xd0] sm:$0xf]
  %v99 = vld [vmem:[%s0 + $0xd4] sm:$0xf]
  %v100 = vld [vmem:[%s0 + $0xd8] sm:$0xf]
  %v101 = vld [vmem:[%s0 + $0xdc] sm:$0xf]
  %v102 = vld [vmem:[%s0 + $0xe0] sm:$0xf]
  %v103 = vld [vmem:[%s0 + $0xe4] sm:$0xf]
  %v104 = vld [vmem:[%s0 + $0xe8] sm:$0xf]
  %v105 = vld [vmem:[%s0 + $0xec] sm:$0xf]
  %v106 = vld [vmem:[%s0 + $0xf0] sm:$0xf]
  %v107 = vld [vmem:[%s0 + $0xf4] sm:$0xf]
  %v108 = vld [vmem:[%s0 + $0xf8] sm:$0xf]
  %v109 = vld [vmem:[%s0 + $0xfc] sm:$0xf]
  %v110 = vld [vmem:[%s4] sm:$0xf]
  %v111 = vld [vmem:[%s5] sm:$0x1]
  %v113 = vlaneseq
  %v114 = vshrl.u32 %v113, 7
  %v115 = vsub.s32 0, %v114
  %v116 = vrot.slane %v111, %v115
  %v182 = vunpack.c.l.b16 %v46
  %v183 = vunpack.c.l.b16 %v47
  %v184 = vunpack.c.l.b16 %v48
  %v185 = vunpack.c.l.b16 %v49
  %v186 = vunpack.c.l.b16 %v50
  %v187 = vunpack.c.l.b16 %v51
  %v188 = vunpack.c.l.b16 %v52
  %v189 = vunpack.c.l.b16 %v53
  %v190 = vunpack.c.l.b16 %v54
  %v191 = vunpack.c.l.b16 %v55
  %v192 = vunpack.c.l.b16 %v56
  %v193 = vunpack.c.l.b16 %v57
  %v194 = vunpack.c.l.b16 %v58
  %v195 = vunpack.c.l.b16 %v59
  %v196 = vunpack.c.l.b16 %v60
  %v197 = vunpack.c.l.b16 %v61
  %v198 = vunpack.c.l.b16 %v62
  %v199 = vunpack.c.l.b16 %v63
  %v200 = vunpack.c.l.b16 %v64
  %v201 = vunpack.c.l.b16 %v65
  %v202 = vunpack.c.l.b16 %v66
  %v203 = vunpack.c.l.b16 %v67
  %v204 = vunpack.c.l.b16 %v68
  %v205 = vunpack.c.l.b16 %v69
  %v206 = vunpack.c.l.b16 %v70
  %v207 = vunpack.c.l.b16 %v71
  %v208 = vunpack.c.l.b16 %v72
  %v209 = vunpack.c.l.b16 %v73
  %v210 = vunpack.c.l.b16 %v74
  %v211 = vunpack.c.l.b16 %v75
  %v212 = vunpack.c.l.b16 %v76
  %v213 = vunpack.c.l.b16 %v77
  %v214 = vunpack.c.l.b16 %v78
  %v215 = vunpack.c.l.b16 %v79
  %v216 = vunpack.c.l.b16 %v80
  %v217 = vunpack.c.l.b16 %v81
  %v218 = vunpack.c.l.b16 %v82
  %v219 = vunpack.c.l.b16 %v83
  %v220 = vunpack.c.l.b16 %v84
  %v221 = vunpack.c.l.b16 %v85
  %v222 = vunpack.c.l.b16 %v86
  %v223 = vunpack.c.l.b16 %v87
  %v224 = vunpack.c.l.b16 %v88
  %v225 = vunpack.c.l.b16 %v89
  %v226 = vunpack.c.l.b16 %v90
  %v227 = vunpack.c.l.b16 %v91
  %v228 = vunpack.c.l.b16 %v92
  %v229 = vunpack.c.l.b16 %v93
  %v230 = vunpack.c.l.b16 %v94
  %v231 = vunpack.c.l.b16 %v95
  %v232 = vunpack.c.l.b16 %v96
  %v233 = vunpack.c.l.b16 %v97
  %v234 = vunpack.c.l.b16 %v98
  %v235 = vunpack.c.l.b16 %v99
  %v236 = vunpack.c.l.b16 %v100
  %v237 = vunpack.c.l.b16 %v101
  %v238 = vunpack.c.l.b16 %v102
  %v239 = vunpack.c.l.b16 %v103
  %v240 = vunpack.c.l.b16 %v104
  %v241 = vunpack.c.l.b16 %v105
  %v242 = vunpack.c.l.b16 %v106
  %v243 = vunpack.c.l.b16 %v107
  %v244 = vunpack.c.l.b16 %v108
  %v245 = vunpack.c.l.b16 %v109
  %v246 = vpack.c.b16 %v183, %v182
  %v247 = vpack.c.b16 %v185, %v184
  %v248 = vpack.c.b16 %v187, %v186
  %v249 = vpack.c.b16 %v189, %v188
  %v250 = vpack.c.b16 %v191, %v190
  %v251 = vpack.c.b16 %v193, %v192
  %v252 = vpack.c.b16 %v195, %v194
  %v253 = vpack.c.b16 %v197, %v196
  %v254 = vpack.c.b16 %v199, %v198
  %v255 = vpack.c.b16 %v201, %v200
  %v256 = vpack.c.b16 %v203, %v202
  %v257 = vpack.c.b16 %v205, %v204
  %v258 = vpack.c.b16 %v207, %v206
  %v259 = vpack.c.b16 %v209, %v208
  %v260 = vpack.c.b16 %v211, %v210
  %v261 = vpack.c.b16 %v213, %v212
  %v262 = vpack.c.b16 %v215, %v214
  %v263 = vpack.c.b16 %v217, %v216
  %v264 = vpack.c.b16 %v219, %v218
  %v265 = vpack.c.b16 %v221, %v220
  %v266 = vpack.c.b16 %v223, %v222
  %v267 = vpack.c.b16 %v225, %v224
  %v268 = vpack.c.b16 %v227, %v226
  %v269 = vpack.c.b16 %v229, %v228
  %v270 = vpack.c.b16 %v231, %v230
  %v271 = vpack.c.b16 %v233, %v232
  %v272 = vpack.c.b16 %v235, %v234
  %v273 = vpack.c.b16 %v237, %v236
  %v274 = vpack.c.b16 %v239, %v238
  %v275 = vpack.c.b16 %v241, %v240
  %v276 = vpack.c.b16 %v243, %v242
  %v277 = vpack.c.b16 %v245, %v244
  %vm278 = vcmask 64512
  %v280 = vsel %vm278, %v246, 0
  %v283 = vsel %vm278, %v247, 0
  %v286 = vsel %vm278, %v248, 0
  %v289 = vsel %vm278, %v249, 0
  %v292 = vsel %vm278, %v250, 0
  %v295 = vsel %vm278, %v251, 0
  %v298 = vsel %vm278, %v252, 0
  %v301 = vsel %vm278, %v253, 0
  %v304 = vsel %vm278, %v254, 0
  %v307 = vsel %vm278, %v255, 0
  %v310 = vsel %vm278, %v256, 0
  %v313 = vsel %vm278, %v257, 0
  %v316 = vsel %vm278, %v258, 0
  %v319 = vsel %vm278, %v259, 0
  %v322 = vsel %vm278, %v260, 0
  %v325 = vsel %vm278, %v261, 0
  %v328 = vsel %vm278, %v262, 0
  %v331 = vsel %vm278, %v263, 0
  %v334 = vsel %vm278, %v264, 0
  %v337 = vsel %vm278, %v265, 0
  %v340 = vsel %vm278, %v266, 0
  %v343 = vsel %vm278, %v267, 0
  %v346 = vsel %vm278, %v268, 0
  %v349 = vsel %vm278, %v269, 0
  %v352 = vsel %vm278, %v270, 0
  %v355 = vsel %vm278, %v271, 0
  %v358 = vsel %vm278, %v272, 0
  %v361 = vsel %vm278, %v273, 0
  %v364 = vsel %vm278, %v274, 0
  %v367 = vsel %vm278, %v275, 0
  %v370 = vsel %vm278, %v276, 0
  %v373 = vsel %vm278, %v277, 0
  %vm375 = vcmask 1043456
  %v377 = vsel %vm375, %v110, 0
  %379 = vmatprep.subr.bf16.mxu0 0
  %380 = vmatpush1.bf16.msra.mxu0 0
  %381 = vmatprep.subr.bf16.mxu0 0
  %382 = vmatpush1.bf16.msra.mxu0 0
  %383 = vmatprep.subr.bf16.mxu0 0
  %384 = vmatpush1.bf16.msra.mxu0 0
  %385 = vmatprep.subr.bf16.mxu0 0
  %386 = vmatpush1.bf16.msra.mxu0 0
  %387 = vmatprep.subr.bf16.mxu0 0
  %388 = vmatpush1.bf16.msra.mxu0 0
  %389 = vmatprep.subr.bf16.mxu0 0
  %390 = vmatpush1.bf16.msra.mxu0 0
  %391 = vmatprep.subr.bf16.mxu0 0
  %392 = vmatpush1.bf16.msra.mxu0 0
  %393 = vmatprep.subr.bf16.mxu0 0
  %394 = vmatpush1.bf16.msra.mxu0 %v377
  %395 = vmatprep.subr.bf16.mxu0 0
  %396 = vmatpush2.bf16.msra.mxu0 0
  %397 = vmatprep.subr.bf16.mxu0 0
  %398 = vmatpush2.bf16.msra.mxu0 0
  %399 = vmatprep.subr.bf16.mxu0 0
  %400 = vmatpush2.bf16.msra.mxu0 0
  %401 = vmatprep.subr.bf16.mxu0 0
  %402 = vmatpush2.bf16.msra.mxu0 0
  %403 = vmatprep.subr.bf16.mxu0 0
  %404 = vmatpush2.bf16.msra.mxu0 0
  %405 = vmatprep.subr.bf16.mxu0 0
  %406 = vmatpush2.bf16.msra.mxu0 0
  %407 = vmatprep.subr.bf16.mxu0 0
  %408 = vmatpush2.bf16.msra.mxu0 0
  %409 = vmatprep.subr.bf16.mxu0 0
  %410 = vmatpush2.bf16.msra.mxu0 0
  %411 = vmatprep.mubr.bf16.mxu0 0
  %412 = vmatmul.mubr.bf16.gmra.mxu0 %v280
  %v413 = vpop.f32.mrf.mxu0
  %v414 = vadd.f32 %v116, %v413
  %v415 = vpop.f32.mrf.mxu0
  %v416 = vpop.f32.mrf.mxu0
  %v417 = vadd.f32 %v116, %v416
  %v418 = vpop.f32.mrf.mxu0
  %419 = vmatprep.mubr.bf16.mxu0 0
  %420 = vmatmul.mubr.bf16.gmra.mxu0 %v283
  %v421 = vpop.f32.mrf.mxu0
  %v422 = vadd.f32 %v116, %v421
  %v423 = vpop.f32.mrf.mxu0
  %v424 = vpop.f32.mrf.mxu0
  %v425 = vadd.f32 %v116, %v424
  %v426 = vpop.f32.mrf.mxu0
  %427 = vmatprep.mubr.bf16.mxu0 0
  %428 = vmatmul.mubr.bf16.gmra.mxu0 %v286
  %v429 = vpop.f32.mrf.mxu0
  %v430 = vadd.f32 %v116, %v429
  %v431 = vpop.f32.mrf.mxu0
  %v432 = vpop.f32.mrf.mxu0
  %v433 = vadd.f32 %v116, %v432
  %v434 = vpop.f32.mrf.mxu0
  %435 = vmatprep.mubr.bf16.mxu0 0
  %436 = vmatmul.mubr.bf16.gmra.mxu0 %v289
  %v437 = vpop.f32.mrf.mxu0
  %v438 = vadd.f32 %v116, %v437
  %v439 = vpop.f32.mrf.mxu0
  %v440 = vpop.f32.mrf.mxu0
  %v441 = vadd.f32 %v116, %v440
  %v442 = vpop.f32.mrf.mxu0
  %443 = vmatprep.mubr.bf16.mxu0 0
  %444 = vmatmul.mubr.bf16.gmra.mxu0 %v292
  %v445 = vpop.f32.mrf.mxu0
  %v446 = vadd.f32 %v116, %v445
  %v447 = vpop.f32.mrf.mxu0
  %v448 = vpop.f32.mrf.mxu0
  %v449 = vadd.f32 %v116, %v448
  %v450 = vpop.f32.mrf.mxu0
  %451 = vmatprep.mubr.bf16.mxu0 0
  %452 = vmatmul.mubr.bf16.gmra.mxu0 %v295
  %v453 = vpop.f32.mrf.mxu0
  %v454 = vadd.f32 %v116, %v453
  %v455 = vpop.f32.mrf.mxu0
  %v456 = vpop.f32.mrf.mxu0
  %v457 = vadd.f32 %v116, %v456
  %v458 = vpop.f32.mrf.mxu0
  %459 = vmatprep.mubr.bf16.mxu0 0
  %460 = vmatmul.mubr.bf16.gmra.mxu0 %v298
  %v461 = vpop.f32.mrf.mxu0
  %v462 = vadd.f32 %v116, %v461
  %v463 = vpop.f32.mrf.mxu0
  %v464 = vpop.f32.mrf.mxu0
  %v465 = vadd.f32 %v116, %v464
  %v466 = vpop.f32.mrf.mxu0
  %467 = vmatprep.mubr.bf16.mxu0 0
  %468 = vmatmul.mubr.bf16.gmra.mxu0 %v301
  %v469 = vpop.f32.mrf.mxu0
  %v470 = vadd.f32 %v116, %v469
  %v471 = vpop.f32.mrf.mxu0
  %v472 = vpop.f32.mrf.mxu0
  %v473 = vadd.f32 %v116, %v472
  %v474 = vpop.f32.mrf.mxu0
  %475 = vmatprep.mubr.bf16.mxu0 0
  %476 = vmatmul.mubr.bf16.gmra.mxu0 %v304
  %v477 = vpop.f32.mrf.mxu0
  %v478 = vadd.f32 %v116, %v477
  %v479 = vpop.f32.mrf.mxu0
  %v480 = vpop.f32.mrf.mxu0
  %v481 = vadd.f32 %v116, %v480
  %v482 = vpop.f32.mrf.mxu0
  %483 = vmatprep.mubr.bf16.mxu0 0
  %484 = vmatmul.mubr.bf16.gmra.mxu0 %v307
  %v485 = vpop.f32.mrf.mxu0
  %v486 = vadd.f32 %v116, %v485
  %v487 = vpop.f32.mrf.mxu0
  %v488 = vpop.f32.mrf.mxu0
  %v489 = vadd.f32 %v116, %v488
  %v490 = vpop.f32.mrf.mxu0
  %491 = vmatprep.mubr.bf16.mxu0 0
  %492 = vmatmul.mubr.bf16.gmra.mxu0 %v310
  %v493 = vpop.f32.mrf.mxu0
  %v494 = vadd.f32 %v116, %v493
  %v495 = vpop.f32.mrf.mxu0
  %v496 = vpop.f32.mrf.mxu0
  %v497 = vadd.f32 %v116, %v496
  %v498 = vpop.f32.mrf.mxu0
  %499 = vmatprep.mubr.bf16.mxu0 0
  %500 = vmatmul.mubr.bf16.gmra.mxu0 %v313
  %v501 = vpop.f32.mrf.mxu0
  %v502 = vadd.f32 %v116, %v501
  %v503 = vpop.f32.mrf.mxu0
  %v504 = vpop.f32.mrf.mxu0
  %v505 = vadd.f32 %v116, %v504
  %v506 = vpop.f32.mrf.mxu0
  %507 = vmatprep.mubr.bf16.mxu0 0
  %508 = vmatmul.mubr.bf16.gmra.mxu0 %v316
  %v509 = vpop.f32.mrf.mxu0
  %v510 = vadd.f32 %v116, %v509
  %v511 = vpop.f32.mrf.mxu0
  %v512 = vpop.f32.mrf.mxu0
  %v513 = vadd.f32 %v116, %v512
  %v514 = vpop.f32.mrf.mxu0
  %515 = vmatprep.mubr.bf16.mxu0 0
  %516 = vmatmul.mubr.bf16.gmra.mxu0 %v319
  %v517 = vpop.f32.mrf.mxu0
  %v518 = vadd.f32 %v116, %v517
  %v519 = vpop.f32.mrf.mxu0
  %v520 = vpop.f32.mrf.mxu0
  %v521 = vadd.f32 %v116, %v520
  %v522 = vpop.f32.mrf.mxu0
  %523 = vmatprep.mubr.bf16.mxu0 0
  %524 = vmatmul.mubr.bf16.gmra.mxu0 %v322
  %v525 = vpop.f32.mrf.mxu0
  %v526 = vadd.f32 %v116, %v525
  %v527 = vpop.f32.mrf.mxu0
  %v528 = vpop.f32.mrf.mxu0
  %v529 = vadd.f32 %v116, %v528
  %v530 = vpop.f32.mrf.mxu0
  %531 = vmatprep.mubr.bf16.mxu0 0
  %532 = vmatmul.mubr.bf16.gmra.mxu0 %v325
  %v533 = vpop.f32.mrf.mxu0
  %v534 = vadd.f32 %v116, %v533
  %v535 = vpop.f32.mrf.mxu0
  %v536 = vpop.f32.mrf.mxu0
  %v537 = vadd.f32 %v116, %v536
  %v538 = vpop.f32.mrf.mxu0
  %539 = vmatprep.mubr.bf16.mxu0 0
  %540 = vmatmul.mubr.bf16.gmra.mxu0 %v328
  %v541 = vpop.f32.mrf.mxu0
  %v542 = vadd.f32 %v116, %v541
  %v543 = vpop.f32.mrf.mxu0
  %v544 = vpop.f32.mrf.mxu0
  %v545 = vadd.f32 %v116, %v544
  %v546 = vpop.f32.mrf.mxu0
  %547 = vmatprep.mubr.bf16.mxu0 0
  %548 = vmatmul.mubr.bf16.gmra.mxu0 %v331
  %v549 = vpop.f32.mrf.mxu0
  %v550 = vadd.f32 %v116, %v549
  %v551 = vpop.f32.mrf.mxu0
  %v552 = vpop.f32.mrf.mxu0
  %v553 = vadd.f32 %v116, %v552
  %v554 = vpop.f32.mrf.mxu0
  %555 = vmatprep.mubr.bf16.mxu0 0
  %556 = vmatmul.mubr.bf16.gmra.mxu0 %v334
  %v557 = vpop.f32.mrf.mxu0
  %v558 = vadd.f32 %v116, %v557
  %v559 = vpop.f32.mrf.mxu0
  %v560 = vpop.f32.mrf.mxu0
  %v561 = vadd.f32 %v116, %v560
  %v562 = vpop.f32.mrf.mxu0
  %563 = vmatprep.mubr.bf16.mxu0 0
  %564 = vmatmul.mubr.bf16.gmra.mxu0 %v337
  %v565 = vpop.f32.mrf.mxu0
  %v566 = vadd.f32 %v116, %v565
  %v567 = vpop.f32.mrf.mxu0
  %v568 = vpop.f32.mrf.mxu0
  %v569 = vadd.f32 %v116, %v568
  %v570 = vpop.f32.mrf.mxu0
  %571 = vmatprep.mubr.bf16.mxu0 0
  %572 = vmatmul.mubr.bf16.gmra.mxu0 %v340
  %v573 = vpop.f32.mrf.mxu0
  %v574 = vadd.f32 %v116, %v573
  %v575 = vpop.f32.mrf.mxu0
  %v576 = vpop.f32.mrf.mxu0
  %v577 = vadd.f32 %v116, %v576
  %v578 = vpop.f32.mrf.mxu0
  %579 = vmatprep.mubr.bf16.mxu0 0
  %580 = vmatmul.mubr.bf16.gmra.mxu0 %v343
  %v581 = vpop.f32.mrf.mxu0
  %v582 = vadd.f32 %v116, %v581
  %v583 = vpop.f32.mrf.mxu0
  %v584 = vpop.f32.mrf.mxu0
  %v585 = vadd.f32 %v116, %v584
  %v586 = vpop.f32.mrf.mxu0
  %587 = vmatprep.mubr.bf16.mxu0 0
  %588 = vmatmul.mubr.bf16.gmra.mxu0 %v346
  %v589 = vpop.f32.mrf.mxu0
  %v590 = vadd.f32 %v116, %v589
  %v591 = vpop.f32.mrf.mxu0
  %v592 = vpop.f32.mrf.mxu0
  %v593 = vadd.f32 %v116, %v592
  %v594 = vpop.f32.mrf.mxu0
  %595 = vmatprep.mubr.bf16.mxu0 0
  %596 = vmatmul.mubr.bf16.gmra.mxu0 %v349
  %v597 = vpop.f32.mrf.mxu0
  %v598 = vadd.f32 %v116, %v597
  %v599 = vpop.f32.mrf.mxu0
  %v600 = vpop.f32.mrf.mxu0
  %v601 = vadd.f32 %v116, %v600
  %v602 = vpop.f32.mrf.mxu0
  %603 = vmatprep.mubr.bf16.mxu0 0
  %604 = vmatmul.mubr.bf16.gmra.mxu0 %v352
  %v605 = vpop.f32.mrf.mxu0
  %v606 = vadd.f32 %v116, %v605
  %v607 = vpop.f32.mrf.mxu0
  %v608 = vpop.f32.mrf.mxu0
  %v609 = vadd.f32 %v116, %v608
  %v610 = vpop.f32.mrf.mxu0
  %611 = vmatprep.mubr.bf16.mxu0 0
  %612 = vmatmul.mubr.bf16.gmra.mxu0 %v355
  %v613 = vpop.f32.mrf.mxu0
  %v614 = vadd.f32 %v116, %v613
  %v615 = vpop.f32.mrf.mxu0
  %v616 = vpop.f32.mrf.mxu0
  %v617 = vadd.f32 %v116, %v616
  %v618 = vpop.f32.mrf.mxu0
  %619 = vmatprep.mubr.bf16.mxu0 0
  %620 = vmatmul.mubr.bf16.gmra.mxu0 %v358
  %v621 = vpop.f32.mrf.mxu0
  %v622 = vadd.f32 %v116, %v621
  %v623 = vpop.f32.mrf.mxu0
  %v624 = vpop.f32.mrf.mxu0
  %v625 = vadd.f32 %v116, %v624
  %v626 = vpop.f32.mrf.mxu0
  %627 = vmatprep.mubr.bf16.mxu0 0
  %628 = vmatmul.mubr.bf16.gmra.mxu0 %v361
  %v629 = vpop.f32.mrf.mxu0
  %v630 = vadd.f32 %v116, %v629
  %v631 = vpop.f32.mrf.mxu0
  %v632 = vpop.f32.mrf.mxu0
  %v633 = vadd.f32 %v116, %v632
  %v634 = vpop.f32.mrf.mxu0
  %635 = vmatprep.mubr.bf16.mxu0 0
  %636 = vmatmul.mubr.bf16.gmra.mxu0 %v364
  %v637 = vpop.f32.mrf.mxu0
  %v638 = vadd.f32 %v116, %v637
  %v639 = vpop.f32.mrf.mxu0
  %v640 = vpop.f32.mrf.mxu0
  %v641 = vadd.f32 %v116, %v640
  %v642 = vpop.f32.mrf.mxu0
  %643 = vmatprep.mubr.bf16.mxu0 0
  %644 = vmatmul.mubr.bf16.gmra.mxu0 %v367
  %v645 = vpop.f32.mrf.mxu0
  %v646 = vadd.f32 %v116, %v645
  %v647 = vpop.f32.mrf.mxu0
  %v648 = vpop.f32.mrf.mxu0
  %v649 = vadd.f32 %v116, %v648
  %v650 = vpop.f32.mrf.mxu0
  %651 = vmatprep.mubr.bf16.mxu0 0
  %652 = vmatmul.mubr.bf16.gmra.mxu0 %v370
  %v653 = vpop.f32.mrf.mxu0
  %v654 = vadd.f32 %v116, %v653
  %v655 = vpop.f32.mrf.mxu0
  %v656 = vpop.f32.mrf.mxu0
  %v657 = vadd.f32 %v116, %v656
  %v658 = vpop.f32.mrf.mxu0
  %659 = vmatprep.mubr.bf16.mxu0 0
  %660 = vmatmul.mubr.bf16.gmra.mxu0 %v373
  %v661 = vpop.f32.mrf.mxu0
  %v662 = vadd.f32 %v116, %v661
  %v663 = vpop.f32.mrf.mxu0
  %v664 = vpop.f32.mrf.mxu0
  %v665 = vadd.f32 %v116, %v664
  %v666 = vpop.f32.mrf.mxu0
  %667 = vdwg.mxu0
  %v668 = vmax.f32 %v414, 0.0
  %v669 = vmax.f32 %v417, 0.0
  %v670 = vmax.f32 %v422, 0.0
  %v671 = vmax.f32 %v425, 0.0
  %v672 = vmax.f32 %v430, 0.0
  %v673 = vmax.f32 %v433, 0.0
  %v674 = vmax.f32 %v438, 0.0
  %v675 = vmax.f32 %v441, 0.0
  %v676 = vmax.f32 %v446, 0.0
  %v677 = vmax.f32 %v449, 0.0
  %v678 = vmax.f32 %v454, 0.0
  %v679 = vmax.f32 %v457, 0.0
  %v680 = vmax.f32 %v462, 0.0
  %v681 = vmax.f32 %v465, 0.0
  %v682 = vmax.f32 %v470, 0.0
  %v683 = vmax.f32 %v473, 0.0
  %v684 = vmax.f32 %v478, 0.0
  %v685 = vmax.f32 %v481, 0.0
  %v686 = vmax.f32 %v486, 0.0
  %v687 = vmax.f32 %v489, 0.0
  %v688 = vmax.f32 %v494, 0.0
  %v689 = vmax.f32 %v497, 0.0
  %v690 = vmax.f32 %v502, 0.0
  %v691 = vmax.f32 %v505, 0.0
  %v692 = vmax.f32 %v510, 0.0
  %v693 = vmax.f32 %v513, 0.0
  %v694 = vmax.f32 %v518, 0.0
  %v695 = vmax.f32 %v521, 0.0
  %v696 = vmax.f32 %v526, 0.0
  %v697 = vmax.f32 %v529, 0.0
  %v698 = vmax.f32 %v534, 0.0
  %v699 = vmax.f32 %v537, 0.0
  %v700 = vmax.f32 %v542, 0.0
  %v701 = vmax.f32 %v545, 0.0
  %v702 = vmax.f32 %v550, 0.0
  %v703 = vmax.f32 %v553, 0.0
  %v704 = vmax.f32 %v558, 0.0
  %v705 = vmax.f32 %v561, 0.0
  %v706 = vmax.f32 %v566, 0.0
  %v707 = vmax.f32 %v569, 0.0
  %v708 = vmax.f32 %v574, 0.0
  %v709 = vmax.f32 %v577, 0.0
  %v710 = vmax.f32 %v582, 0.0
  %v711 = vmax.f32 %v585, 0.0
  %v712 = vmax.f32 %v590, 0.0
  %v713 = vmax.f32 %v593, 0.0
  %v714 = vmax.f32 %v598, 0.0
  %v715 = vmax.f32 %v601, 0.0
  %v716 = vmax.f32 %v606, 0.0
  %v717 = vmax.f32 %v609, 0.0
  %v718 = vmax.f32 %v614, 0.0
  %v719 = vmax.f32 %v617, 0.0
  %v720 = vmax.f32 %v622, 0.0
  %v721 = vmax.f32 %v625, 0.0
  %v722 = vmax.f32 %v630, 0.0
  %v723 = vmax.f32 %v633, 0.0
  %v724 = vmax.f32 %v638, 0.0
  %v725 = vmax.f32 %v641, 0.0
  %v726 = vmax.f32 %v646, 0.0
  %v727 = vmax.f32 %v649, 0.0
  %v728 = vmax.f32 %v654, 0.0
  %v729 = vmax.f32 %v657, 0.0
  %v730 = vmax.f32 %v662, 0.0
  %v731 = vmax.f32 %v665, 0.0
  %v732 = vpack.c.bf16 %v669, %v668
  %v733 = vpack.c.bf16 %v671, %v670
  %v734 = vpack.c.bf16 %v673, %v672
  %v735 = vpack.c.bf16 %v675, %v674
  %v736 = vpack.c.bf16 %v677, %v676
  %v737 = vpack.c.bf16 %v679, %v678
  %v738 = vpack.c.bf16 %v681, %v680
  %v739 = vpack.c.bf16 %v683, %v682
  %v740 = vpack.c.bf16 %v685, %v684
  %v741 = vpack.c.bf16 %v687, %v686
  %v742 = vpack.c.bf16 %v689, %v688
  %v743 = vpack.c.bf16 %v691, %v690
  %v744 = vpack.c.bf16 %v693, %v692
  %v745 = vpack.c.bf16 %v695, %v694
  %v746 = vpack.c.bf16 %v697, %v696
  %v747 = vpack.c.bf16 %v699, %v698
  %v748 = vpack.c.bf16 %v701, %v700
  %v749 = vpack.c.bf16 %v703, %v702
  %v750 = vpack.c.bf16 %v705, %v704
  %v751 = vpack.c.bf16 %v707, %v706
  %v752 = vpack.c.bf16 %v709, %v708
  %v753 = vpack.c.bf16 %v711, %v710
  %v754 = vpack.c.bf16 %v713, %v712
  %v755 = vpack.c.bf16 %v715, %v714
  %v756 = vpack.c.bf16 %v717, %v716
  %v757 = vpack.c.bf16 %v719, %v718
  %v758 = vpack.c.bf16 %v721, %v720
  %v759 = vpack.c.bf16 %v723, %v722
  %v760 = vpack.c.bf16 %v725, %v724
  %v761 = vpack.c.bf16 %v727, %v726
  %v762 = vpack.c.bf16 %v729, %v728
  %v763 = vpack.c.bf16 %v731, %v730
  %v764 = vld [vmem:[%s6] sm:$0xf]
  %v765 = vld [vmem:[%s6 + $0x4] sm:$0xf]
  %v766 = vld [vmem:[%s6 + $0x8] sm:$0xf]
  %v767 = vld [vmem:[%s6 + $0xc] sm:$0xf]
  %v768 = vld [vmem:[%s6 + $0x10] sm:$0xf]
  %v769 = vld [vmem:[%s6 + $0x14] sm:$0xf]
  %v770 = vld [vmem:[%s6 + $0x18] sm:$0xf]
  %v771 = vld [vmem:[%s6 + $0x1c] sm:$0xf]
  %v772 = vld [vmem:[%s7] sm:$0x1]
  %v774 = vlaneseq
  %v775 = vshrl.u32 %v774, 7
  %v776 = vsub.s32 0, %v775
  %v777 = vrot.slane %v772, %v776
  %v787 = vunpack.c.l.b16 %v764
  %v788 = vunpack.c.l.b16 %v765
  %v789 = vunpack.c.l.b16 %v766
  %v790 = vunpack.c.l.b16 %v767
  %v791 = vunpack.c.l.b16 %v768
  %v792 = vunpack.c.l.b16 %v769
  %v793 = vunpack.c.l.b16 %v770
  %v794 = vunpack.c.l.b16 %v771
  %v795 = vpack.c.b16 %v788, %v787
  %v796 = vpack.c.b16 %v790, %v789
  %v797 = vpack.c.b16 %v792, %v791
  %v798 = vpack.c.b16 %v794, %v793
  %vm803 = vcmask 523264
  %v805 = vsel %vm803, %v732, 0
  %v808 = vsel %vm803, %v733, 0
  %v811 = vsel %vm803, %v734, 0
  %v814 = vsel %vm803, %v735, 0
  %v817 = vsel %vm803, %v736, 0
  %v820 = vsel %vm803, %v737, 0
  %v823 = vsel %vm803, %v738, 0
  %v826 = vsel %vm803, %v739, 0
  %v829 = vsel %vm803, %v740, 0
  %v832 = vsel %vm803, %v741, 0
  %v835 = vsel %vm803, %v742, 0
  %v838 = vsel %vm803, %v743, 0
  %v841 = vsel %vm803, %v744, 0
  %v844 = vsel %vm803, %v745, 0
  %v847 = vsel %vm803, %v746, 0
  %v850 = vsel %vm803, %v747, 0
  %v853 = vsel %vm803, %v748, 0
  %v856 = vsel %vm803, %v749, 0
  %v859 = vsel %vm803, %v750, 0
  %v862 = vsel %vm803, %v751, 0
  %v865 = vsel %vm803, %v752, 0
  %v868 = vsel %vm803, %v753, 0
  %v871 = vsel %vm803, %v754, 0
  %v874 = vsel %vm803, %v755, 0
  %v877 = vsel %vm803, %v756, 0
  %v880 = vsel %vm803, %v757, 0
  %v883 = vsel %vm803, %v758, 0
  %v886 = vsel %vm803, %v759, 0
  %v889 = vsel %vm803, %v760, 0
  %v892 = vsel %vm803, %v761, 0
  %v895 = vsel %vm803, %v762, 0
  %v898 = vsel %vm803, %v763, 0
  %900 = vmatprep.subr.bf16.mxu0 0
  %901 = vmatpush1.bf16.msra.mxu0 0
  %902 = vmatprep.subr.bf16.mxu0 0
  %903 = vmatpush1.bf16.msra.mxu0 0
  %904 = vmatprep.subr.bf16.mxu0 0
  %905 = vmatpush1.bf16.msra.mxu0 0
  %906 = vmatprep.subr.bf16.mxu0 0
  %907 = vmatpush1.bf16.msra.mxu0 0
  %908 = vmatprep.subr.bf16.mxu0 0
  %909 = vmatpush1.bf16.msra.mxu0 %v798
  %910 = vmatprep.subr.bf16.mxu0 0
  %911 = vmatpush1.bf16.msra.mxu0 %v797
  %912 = vmatprep.subr.bf16.mxu0 0
  %913 = vmatpush1.bf16.msra.mxu0 %v796
  %914 = vmatprep.subr.bf16.mxu0 0
  %915 = vmatpush1.bf16.msra.mxu0 %v795
  %916 = vmatprep.subr.bf16.mxu0 0
  %917 = vmatpush2.bf16.msra.mxu0 0
  %918 = vmatprep.subr.bf16.mxu0 0
  %919 = vmatpush2.bf16.msra.mxu0 0
  %920 = vmatprep.subr.bf16.mxu0 0
  %921 = vmatpush2.bf16.msra.mxu0 0
  %922 = vmatprep.subr.bf16.mxu0 0
  %923 = vmatpush2.bf16.msra.mxu0 0
  %924 = vmatprep.subr.bf16.mxu0 0
  %925 = vmatpush2.bf16.msra.mxu0 0
  %926 = vmatprep.subr.bf16.mxu0 0
  %927 = vmatpush2.bf16.msra.mxu0 0
  %928 = vmatprep.subr.bf16.mxu0 0
  %929 = vmatpush2.bf16.msra.mxu0 0
  %930 = vmatprep.subr.bf16.mxu0 0
  %931 = vmatpush2.bf16.msra.mxu0 0
  %932 = vmatprep.mubr.bf16.mxu0 0
  %933 = vmatmul.mubr.bf16.gmra.mxu0 %v805
  %v934 = vpop.f32.mrf.mxu0
  %v935 = vadd.f32 %v777, %v934
  %v936 = vpop.f32.mrf.mxu0
  %v937 = vpop.f32.mrf.mxu0
  %v938 = vadd.f32 %v777, %v937
  %v939 = vpop.f32.mrf.mxu0
  %940 = vmatprep.mubr.bf16.mxu0 0
  %941 = vmatmul.mubr.bf16.gmra.mxu0 %v808
  %v942 = vpop.f32.mrf.mxu0
  %v943 = vadd.f32 %v777, %v942
  %v944 = vpop.f32.mrf.mxu0
  %v945 = vpop.f32.mrf.mxu0
  %v946 = vadd.f32 %v777, %v945
  %v947 = vpop.f32.mrf.mxu0
  %948 = vmatprep.mubr.bf16.mxu0 0
  %949 = vmatmul.mubr.bf16.gmra.mxu0 %v811
  %v950 = vpop.f32.mrf.mxu0
  %v951 = vadd.f32 %v777, %v950
  %v952 = vpop.f32.mrf.mxu0
  %v953 = vpop.f32.mrf.mxu0
  %v954 = vadd.f32 %v777, %v953
  %v955 = vpop.f32.mrf.mxu0
  %956 = vmatprep.mubr.bf16.mxu0 0
  %957 = vmatmul.mubr.bf16.gmra.mxu0 %v814
  %v958 = vpop.f32.mrf.mxu0
  %v959 = vadd.f32 %v777, %v958
  %v960 = vpop.f32.mrf.mxu0
  %v961 = vpop.f32.mrf.mxu0
  %v962 = vadd.f32 %v777, %v961
  %v963 = vpop.f32.mrf.mxu0
  %964 = vmatprep.mubr.bf16.mxu0 0
  %965 = vmatmul.mubr.bf16.gmra.mxu0 %v817
  %v966 = vpop.f32.mrf.mxu0
  %v967 = vadd.f32 %v777, %v966
  %v968 = vpop.f32.mrf.mxu0
  %v969 = vpop.f32.mrf.mxu0
  %v970 = vadd.f32 %v777, %v969
  %v971 = vpop.f32.mrf.mxu0
  %972 = vmatprep.mubr.bf16.mxu0 0
  %973 = vmatmul.mubr.bf16.gmra.mxu0 %v820
  %v974 = vpop.f32.mrf.mxu0
  %v975 = vadd.f32 %v777, %v974
  %v976 = vpop.f32.mrf.mxu0
  %v977 = vpop.f32.mrf.mxu0
  %v978 = vadd.f32 %v777, %v977
  %v979 = vpop.f32.mrf.mxu0
  %980 = vmatprep.mubr.bf16.mxu0 0
  %981 = vmatmul.mubr.bf16.gmra.mxu0 %v823
  %v982 = vpop.f32.mrf.mxu0
  %v983 = vadd.f32 %v777, %v982
  %v984 = vpop.f32.mrf.mxu0
  %v985 = vpop.f32.mrf.mxu0
  %v986 = vadd.f32 %v777, %v985
  %v987 = vpop.f32.mrf.mxu0
  %988 = vmatprep.mubr.bf16.mxu0 0
  %989 = vmatmul.mubr.bf16.gmra.mxu0 %v826
  %v990 = vpop.f32.mrf.mxu0
  %v991 = vadd.f32 %v777, %v990
  %v992 = vpop.f32.mrf.mxu0
  %v993 = vpop.f32.mrf.mxu0
  %v994 = vadd.f32 %v777, %v993
  %v995 = vpop.f32.mrf.mxu0
  %996 = vmatprep.mubr.bf16.mxu0 0
  %997 = vmatmul.mubr.bf16.gmra.mxu0 %v829
  %v998 = vpop.f32.mrf.mxu0
  %v999 = vadd.f32 %v777, %v998
  %v1000 = vpop.f32.mrf.mxu0
  %v1001 = vpop.f32.mrf.mxu0
  %v1002 = vadd.f32 %v777, %v1001
  %v1003 = vpop.f32.mrf.mxu0
  %1004 = vmatprep.mubr.bf16.mxu0 0
  %1005 = vmatmul.mubr.bf16.gmra.mxu0 %v832
  %v1006 = vpop.f32.mrf.mxu0
  %v1007 = vadd.f32 %v777, %v1006
  %v1008 = vpop.f32.mrf.mxu0
  %v1009 = vpop.f32.mrf.mxu0
  %v1010 = vadd.f32 %v777, %v1009
  %v1011 = vpop.f32.mrf.mxu0
  %1012 = vmatprep.mubr.bf16.mxu0 0
  %1013 = vmatmul.mubr.bf16.gmra.mxu0 %v835
  %v1014 = vpop.f32.mrf.mxu0
  %v1015 = vadd.f32 %v777, %v1014
  %v1016 = vpop.f32.mrf.mxu0
  %v1017 = vpop.f32.mrf.mxu0
  %v1018 = vadd.f32 %v777, %v1017
  %v1019 = vpop.f32.mrf.mxu0
  %1020 = vmatprep.mubr.bf16.mxu0 0
  %1021 = vmatmul.mubr.bf16.gmra.mxu0 %v838
  %v1022 = vpop.f32.mrf.mxu0
  %v1023 = vadd.f32 %v777, %v1022
  %v1024 = vpop.f32.mrf.mxu0
  %v1025 = vpop.f32.mrf.mxu0
  %v1026 = vadd.f32 %v777, %v1025
  %v1027 = vpop.f32.mrf.mxu0
  %1028 = vmatprep.mubr.bf16.mxu0 0
  %1029 = vmatmul.mubr.bf16.gmra.mxu0 %v841
  %v1030 = vpop.f32.mrf.mxu0
  %v1031 = vadd.f32 %v777, %v1030
  %v1032 = vpop.f32.mrf.mxu0
  %v1033 = vpop.f32.mrf.mxu0
  %v1034 = vadd.f32 %v777, %v1033
  %v1035 = vpop.f32.mrf.mxu0
  %1036 = vmatprep.mubr.bf16.mxu0 0
  %1037 = vmatmul.mubr.bf16.gmra.mxu0 %v844
  %v1038 = vpop.f32.mrf.mxu0
  %v1039 = vadd.f32 %v777, %v1038
  %v1040 = vpop.f32.mrf.mxu0
  %v1041 = vpop.f32.mrf.mxu0
  %v1042 = vadd.f32 %v777, %v1041
  %v1043 = vpop.f32.mrf.mxu0
  %1044 = vmatprep.mubr.bf16.mxu0 0
  %1045 = vmatmul.mubr.bf16.gmra.mxu0 %v847
  %v1046 = vpop.f32.mrf.mxu0
  %v1047 = vadd.f32 %v777, %v1046
  %v1048 = vpop.f32.mrf.mxu0
  %v1049 = vpop.f32.mrf.mxu0
  %v1050 = vadd.f32 %v777, %v1049
  %v1051 = vpop.f32.mrf.mxu0
  %1052 = vmatprep.mubr.bf16.mxu0 0
  %1053 = vmatmul.mubr.bf16.gmra.mxu0 %v850
  %v1054 = vpop.f32.mrf.mxu0
  %v1055 = vadd.f32 %v777, %v1054
  %v1056 = vpop.f32.mrf.mxu0
  %v1057 = vpop.f32.mrf.mxu0
  %v1058 = vadd.f32 %v777, %v1057
  %v1059 = vpop.f32.mrf.mxu0
  %1060 = vmatprep.mubr.bf16.mxu0 0
  %1061 = vmatmul.mubr.bf16.gmra.mxu0 %v853
  %v1062 = vpop.f32.mrf.mxu0
  %v1063 = vadd.f32 %v777, %v1062
  %v1064 = vpop.f32.mrf.mxu0
  %v1065 = vpop.f32.mrf.mxu0
  %v1066 = vadd.f32 %v777, %v1065
  %v1067 = vpop.f32.mrf.mxu0
  %1068 = vmatprep.mubr.bf16.mxu0 0
  %1069 = vmatmul.mubr.bf16.gmra.mxu0 %v856
  %v1070 = vpop.f32.mrf.mxu0
  %v1071 = vadd.f32 %v777, %v1070
  %v1072 = vpop.f32.mrf.mxu0
  %v1073 = vpop.f32.mrf.mxu0
  %v1074 = vadd.f32 %v777, %v1073
  %v1075 = vpop.f32.mrf.mxu0
  %1076 = vmatprep.mubr.bf16.mxu0 0
  %1077 = vmatmul.mubr.bf16.gmra.mxu0 %v859
  %v1078 = vpop.f32.mrf.mxu0
  %v1079 = vadd.f32 %v777, %v1078
  %v1080 = vpop.f32.mrf.mxu0
  %v1081 = vpop.f32.mrf.mxu0
  %v1082 = vadd.f32 %v777, %v1081
  %v1083 = vpop.f32.mrf.mxu0
  %1084 = vmatprep.mubr.bf16.mxu0 0
  %1085 = vmatmul.mubr.bf16.gmra.mxu0 %v862
  %v1086 = vpop.f32.mrf.mxu0
  %v1087 = vadd.f32 %v777, %v1086
  %v1088 = vpop.f32.mrf.mxu0
  %v1089 = vpop.f32.mrf.mxu0
  %v1090 = vadd.f32 %v777, %v1089
  %v1091 = vpop.f32.mrf.mxu0
  %1092 = vmatprep.mubr.bf16.mxu0 0
  %1093 = vmatmul.mubr.bf16.gmra.mxu0 %v865
  %v1094 = vpop.f32.mrf.mxu0
  %v1095 = vadd.f32 %v777, %v1094
  %v1096 = vpop.f32.mrf.mxu0
  %v1097 = vpop.f32.mrf.mxu0
  %v1098 = vadd.f32 %v777, %v1097
  %v1099 = vpop.f32.mrf.mxu0
  %1100 = vmatprep.mubr.bf16.mxu0 0
  %1101 = vmatmul.mubr.bf16.gmra.mxu0 %v868
  %v1102 = vpop.f32.mrf.mxu0
  %v1103 = vadd.f32 %v777, %v1102
  %v1104 = vpop.f32.mrf.mxu0
  %v1105 = vpop.f32.mrf.mxu0
  %v1106 = vadd.f32 %v777, %v1105
  %v1107 = vpop.f32.mrf.mxu0
  %1108 = vmatprep.mubr.bf16.mxu0 0
  %1109 = vmatmul.mubr.bf16.gmra.mxu0 %v871
  %v1110 = vpop.f32.mrf.mxu0
  %v1111 = vadd.f32 %v777, %v1110
  %v1112 = vpop.f32.mrf.mxu0
  %v1113 = vpop.f32.mrf.mxu0
  %v1114 = vadd.f32 %v777, %v1113
  %v1115 = vpop.f32.mrf.mxu0
  %1116 = vmatprep.mubr.bf16.mxu0 0
  %1117 = vmatmul.mubr.bf16.gmra.mxu0 %v874
  %v1118 = vpop.f32.mrf.mxu0
  %v1119 = vadd.f32 %v777, %v1118
  %v1120 = vpop.f32.mrf.mxu0
  %v1121 = vpop.f32.mrf.mxu0
  %v1122 = vadd.f32 %v777, %v1121
  %v1123 = vpop.f32.mrf.mxu0
  %1124 = vmatprep.mubr.bf16.mxu0 0
  %1125 = vmatmul.mubr.bf16.gmra.mxu0 %v877
  %v1126 = vpop.f32.mrf.mxu0
  %v1127 = vadd.f32 %v777, %v1126
  %v1128 = vpop.f32.mrf.mxu0
  %v1129 = vpop.f32.mrf.mxu0
  %v1130 = vadd.f32 %v777, %v1129
  %v1131 = vpop.f32.mrf.mxu0
  %1132 = vmatprep.mubr.bf16.mxu0 0
  %1133 = vmatmul.mubr.bf16.gmra.mxu0 %v880
  %v1134 = vpop.f32.mrf.mxu0
  %v1135 = vadd.f32 %v777, %v1134
  %v1136 = vpop.f32.mrf.mxu0
  %v1137 = vpop.f32.mrf.mxu0
  %v1138 = vadd.f32 %v777, %v1137
  %v1139 = vpop.f32.mrf.mxu0
  %1140 = vmatprep.mubr.bf16.mxu0 0
  %1141 = vmatmul.mubr.bf16.gmra.mxu0 %v883
  %v1142 = vpop.f32.mrf.mxu0
  %v1143 = vadd.f32 %v777, %v1142
  %v1144 = vpop.f32.mrf.mxu0
  %v1145 = vpop.f32.mrf.mxu0
  %v1146 = vadd.f32 %v777, %v1145
  %v1147 = vpop.f32.mrf.mxu0
  %1148 = vmatprep.mubr.bf16.mxu0 0
  %1149 = vmatmul.mubr.bf16.gmra.mxu0 %v886
  %v1150 = vpop.f32.mrf.mxu0
  %v1151 = vadd.f32 %v777, %v1150
  %v1152 = vpop.f32.mrf.mxu0
  %v1153 = vpop.f32.mrf.mxu0
  %v1154 = vadd.f32 %v777, %v1153
  %v1155 = vpop.f32.mrf.mxu0
  %1156 = vmatprep.mubr.bf16.mxu0 0
  %1157 = vmatmul.mubr.bf16.gmra.mxu0 %v889
  %v1158 = vpop.f32.mrf.mxu0
  %v1159 = vadd.f32 %v777, %v1158
  %v1160 = vpop.f32.mrf.mxu0
  %v1161 = vpop.f32.mrf.mxu0
  %v1162 = vadd.f32 %v777, %v1161
  %v1163 = vpop.f32.mrf.mxu0
  %1164 = vmatprep.mubr.bf16.mxu0 0
  %1165 = vmatmul.mubr.bf16.gmra.mxu0 %v892
  %v1166 = vpop.f32.mrf.mxu0
  %v1167 = vadd.f32 %v777, %v1166
  %v1168 = vpop.f32.mrf.mxu0
  %v1169 = vpop.f32.mrf.mxu0
  %v1170 = vadd.f32 %v777, %v1169
  %v1171 = vpop.f32.mrf.mxu0
  %1172 = vmatprep.mubr.bf16.mxu0 0
  %1173 = vmatmul.mubr.bf16.gmra.mxu0 %v895
  %v1174 = vpop.f32.mrf.mxu0
  %v1175 = vadd.f32 %v777, %v1174
  %v1176 = vpop.f32.mrf.mxu0
  %v1177 = vpop.f32.mrf.mxu0
  %v1178 = vadd.f32 %v777, %v1177
  %v1179 = vpop.f32.mrf.mxu0
  %1180 = vmatprep.mubr.bf16.mxu0 0
  %1181 = vmatmul.mubr.bf16.gmra.mxu0 %v898
  %v1182 = vpop.f32.mrf.mxu0
  %v1183 = vadd.f32 %v777, %v1182
  %v1184 = vpop.f32.mrf.mxu0
  %v1185 = vpop.f32.mrf.mxu0
  %v1186 = vadd.f32 %v777, %v1185
  %v1187 = vpop.f32.mrf.mxu0
  %1188 = vdwg.mxu0
  %v1189 = vmax.f32 %v935, 0.0
  %v1190 = vmax.f32 %v938, 0.0
  %v1191 = vmax.f32 %v943, 0.0
  %v1192 = vmax.f32 %v946, 0.0
  %v1193 = vmax.f32 %v951, 0.0
  %v1194 = vmax.f32 %v954, 0.0
  %v1195 = vmax.f32 %v959, 0.0
  %v1196 = vmax.f32 %v962, 0.0
  %v1197 = vmax.f32 %v967, 0.0
  %v1198 = vmax.f32 %v970, 0.0
  %v1199 = vmax.f32 %v975, 0.0
  %v1200 = vmax.f32 %v978, 0.0
  %v1201 = vmax.f32 %v983, 0.0
  %v1202 = vmax.f32 %v986, 0.0
  %v1203 = vmax.f32 %v991, 0.0
  %v1204 = vmax.f32 %v994, 0.0
  %v1205 = vmax.f32 %v999, 0.0
  %v1206 = vmax.f32 %v1002, 0.0
  %v1207 = vmax.f32 %v1007, 0.0
  %v1208 = vmax.f32 %v1010, 0.0
  %v1209 = vmax.f32 %v1015, 0.0
  %v1210 = vmax.f32 %v1018, 0.0
  %v1211 = vmax.f32 %v1023, 0.0
  %v1212 = vmax.f32 %v1026, 0.0
  %v1213 = vmax.f32 %v1031, 0.0
  %v1214 = vmax.f32 %v1034, 0.0
  %v1215 = vmax.f32 %v1039, 0.0
  %v1216 = vmax.f32 %v1042, 0.0
  %v1217 = vmax.f32 %v1047, 0.0
  %v1218 = vmax.f32 %v1050, 0.0
  %v1219 = vmax.f32 %v1055, 0.0
  %v1220 = vmax.f32 %v1058, 0.0
  %v1221 = vmax.f32 %v1063, 0.0
  %v1222 = vmax.f32 %v1066, 0.0
  %v1223 = vmax.f32 %v1071, 0.0
  %v1224 = vmax.f32 %v1074, 0.0
  %v1225 = vmax.f32 %v1079, 0.0
  %v1226 = vmax.f32 %v1082, 0.0
  %v1227 = vmax.f32 %v1087, 0.0
  %v1228 = vmax.f32 %v1090, 0.0
  %v1229 = vmax.f32 %v1095, 0.0
  %v1230 = vmax.f32 %v1098, 0.0
  %v1231 = vmax.f32 %v1103, 0.0
  %v1232 = vmax.f32 %v1106, 0.0
  %v1233 = vmax.f32 %v1111, 0.0
  %v1234 = vmax.f32 %v1114, 0.0
  %v1235 = vmax.f32 %v1119, 0.0
  %v1236 = vmax.f32 %v1122, 0.0
  %v1237 = vmax.f32 %v1127, 0.0
  %v1238 = vmax.f32 %v1130, 0.0
  %v1239 = vmax.f32 %v1135, 0.0
  %v1240 = vmax.f32 %v1138, 0.0
  %v1241 = vmax.f32 %v1143, 0.0
  %v1242 = vmax.f32 %v1146, 0.0
  %v1243 = vmax.f32 %v1151, 0.0
  %v1244 = vmax.f32 %v1154, 0.0
  %v1245 = vmax.f32 %v1159, 0.0
  %v1246 = vmax.f32 %v1162, 0.0
  %v1247 = vmax.f32 %v1167, 0.0
  %v1248 = vmax.f32 %v1170, 0.0
  %v1249 = vmax.f32 %v1175, 0.0
  %v1250 = vmax.f32 %v1178, 0.0
  %v1251 = vmax.f32 %v1183, 0.0
  %v1252 = vmax.f32 %v1186, 0.0
  %v1253 = vpack.c.bf16 %v1190, %v1189
  %v1254 = vpack.c.bf16 %v1192, %v1191
  %v1255 = vpack.c.bf16 %v1194, %v1193
  %v1256 = vpack.c.bf16 %v1196, %v1195
  %v1257 = vpack.c.bf16 %v1198, %v1197
  %v1258 = vpack.c.bf16 %v1200, %v1199
  %v1259 = vpack.c.bf16 %v1202, %v1201
  %v1260 = vpack.c.bf16 %v1204, %v1203
  %v1261 = vpack.c.bf16 %v1206, %v1205
  %v1262 = vpack.c.bf16 %v1208, %v1207
  %v1263 = vpack.c.bf16 %v1210, %v1209
  %v1264 = vpack.c.bf16 %v1212, %v1211
  %v1265 = vpack.c.bf16 %v1214, %v1213
  %v1266 = vpack.c.bf16 %v1216, %v1215
  %v1267 = vpack.c.bf16 %v1218, %v1217
  %v1268 = vpack.c.bf16 %v1220, %v1219
  %v1269 = vpack.c.bf16 %v1222, %v1221
  %v1270 = vpack.c.bf16 %v1224, %v1223
  %v1271 = vpack.c.bf16 %v1226, %v1225
  %v1272 = vpack.c.bf16 %v1228, %v1227
  %v1273 = vpack.c.bf16 %v1230, %v1229
  %v1274 = vpack.c.bf16 %v1232, %v1231
  %v1275 = vpack.c.bf16 %v1234, %v1233
  %v1276 = vpack.c.bf16 %v1236, %v1235
  %v1277 = vpack.c.bf16 %v1238, %v1237
  %v1278 = vpack.c.bf16 %v1240, %v1239
  %v1279 = vpack.c.bf16 %v1242, %v1241
  %v1280 = vpack.c.bf16 %v1244, %v1243
  %v1281 = vpack.c.bf16 %v1246, %v1245
  %v1282 = vpack.c.bf16 %v1248, %v1247
  %v1283 = vpack.c.bf16 %v1250, %v1249
  %v1284 = vpack.c.bf16 %v1252, %v1251
  %v1285 = vld [vmem:[%s8] sm:$0xf]
  %v1287 = vsel %vm278, %v1253, 0
  %v1290 = vsel %vm278, %v1254, 0
  %v1293 = vsel %vm278, %v1255, 0
  %v1296 = vsel %vm278, %v1256, 0
  %v1299 = vsel %vm278, %v1257, 0
  %v1302 = vsel %vm278, %v1258, 0
  %v1305 = vsel %vm278, %v1259, 0
  %v1308 = vsel %vm278, %v1260, 0
  %v1311 = vsel %vm278, %v1261, 0
  %v1314 = vsel %vm278, %v1262, 0
  %v1317 = vsel %vm278, %v1263, 0
  %v1320 = vsel %vm278, %v1264, 0
  %v1323 = vsel %vm278, %v1265, 0
  %v1326 = vsel %vm278, %v1266, 0
  %v1329 = vsel %vm278, %v1267, 0
  %v1332 = vsel %vm278, %v1268, 0
  %v1335 = vsel %vm278, %v1269, 0
  %v1338 = vsel %vm278, %v1270, 0
  %v1341 = vsel %vm278, %v1271, 0
  %v1344 = vsel %vm278, %v1272, 0
  %v1347 = vsel %vm278, %v1273, 0
  %v1350 = vsel %vm278, %v1274, 0
  %v1353 = vsel %vm278, %v1275, 0
  %v1356 = vsel %vm278, %v1276, 0
  %v1359 = vsel %vm278, %v1277, 0
  %v1362 = vsel %vm278, %v1278, 0
  %v1365 = vsel %vm278, %v1279, 0
  %v1368 = vsel %vm278, %v1280, 0
  %v1371 = vsel %vm278, %v1281, 0
  %v1374 = vsel %vm278, %v1282, 0
  %v1377 = vsel %vm278, %v1283, 0
  %v1380 = vsel %vm278, %v1284, 0
  %v1383 = vsel %vm375, %v1285, 0
  %1385 = vmatprep.subr.bf16.mxu0 0
  %1386 = vmatpush1.bf16.msra.mxu0 0
  %1387 = vmatprep.subr.bf16.mxu0 0
  %1388 = vmatpush1.bf16.msra.mxu0 0
  %1389 = vmatprep.subr.bf16.mxu0 0
  %1390 = vmatpush1.bf16.msra.mxu0 0
  %1391 = vmatprep.subr.bf16.mxu0 0
  %1392 = vmatpush1.bf16.msra.mxu0 0
  %1393 = vmatprep.subr.bf16.mxu0 0
  %1394 = vmatpush1.bf16.msra.mxu0 0
  %1395 = vmatprep.subr.bf16.mxu0 0
  %1396 = vmatpush1.bf16.msra.mxu0 0
  %1397 = vmatprep.subr.bf16.mxu0 0
  %1398 = vmatpush1.bf16.msra.mxu0 0
  %1399 = vmatprep.subr.bf16.mxu0 0
  %1400 = vmatpush1.bf16.msra.mxu0 %v1383
  %1401 = vmatprep.subr.bf16.mxu0 0
  %1402 = vmatpush2.bf16.msra.mxu0 0
  %1403 = vmatprep.subr.bf16.mxu0 0
  %1404 = vmatpush2.bf16.msra.mxu0 0
  %1405 = vmatprep.subr.bf16.mxu0 0
  %1406 = vmatpush2.bf16.msra.mxu0 0
  %1407 = vmatprep.subr.bf16.mxu0 0
  %1408 = vmatpush2.bf16.msra.mxu0 0
  %1409 = vmatprep.subr.bf16.mxu0 0
  %1410 = vmatpush2.bf16.msra.mxu0 0
  %1411 = vmatprep.subr.bf16.mxu0 0
  %1412 = vmatpush2.bf16.msra.mxu0 0
  %1413 = vmatprep.subr.bf16.mxu0 0
  %1414 = vmatpush2.bf16.msra.mxu0 0
  %1415 = vmatprep.subr.bf16.mxu0 0
  %1416 = vmatpush2.bf16.msra.mxu0 0
  %1417 = vmatprep.mubr.bf16.mxu0 0
  %1418 = vmatmul.mubr.bf16.gmra.mxu0 %v1287
  %v1419 = vpop.f32.mrf.mxu0
  %v1420 = vadd.f32 0.0, %v1419
  %v1421 = vpop.f32.mrf.mxu0
  %v1422 = vpop.f32.mrf.mxu0
  %v1423 = vadd.f32 0.0, %v1422
  %v1424 = vpop.f32.mrf.mxu0
  %1425 = vmatprep.mubr.bf16.mxu0 0
  %1426 = vmatmul.mubr.bf16.gmra.mxu0 %v1290
  %v1427 = vpop.f32.mrf.mxu0
  %v1428 = vadd.f32 0.0, %v1427
  %v1429 = vpop.f32.mrf.mxu0
  %v1430 = vpop.f32.mrf.mxu0
  %v1431 = vadd.f32 0.0, %v1430
  %v1432 = vpop.f32.mrf.mxu0
  %1433 = vmatprep.mubr.bf16.mxu0 0
  %1434 = vmatmul.mubr.bf16.gmra.mxu0 %v1293
  %v1435 = vpop.f32.mrf.mxu0
  %v1436 = vadd.f32 0.0, %v1435
  %v1437 = vpop.f32.mrf.mxu0
  %v1438 = vpop.f32.mrf.mxu0
  %v1439 = vadd.f32 0.0, %v1438
  %v1440 = vpop.f32.mrf.mxu0
  %1441 = vmatprep.mubr.bf16.mxu0 0
  %1442 = vmatmul.mubr.bf16.gmra.mxu0 %v1296
  %v1443 = vpop.f32.mrf.mxu0
  %v1444 = vadd.f32 0.0, %v1443
  %v1445 = vpop.f32.mrf.mxu0
  %v1446 = vpop.f32.mrf.mxu0
  %v1447 = vadd.f32 0.0, %v1446
  %v1448 = vpop.f32.mrf.mxu0
  %1449 = vmatprep.mubr.bf16.mxu0 0
  %1450 = vmatmul.mubr.bf16.gmra.mxu0 %v1299
  %v1451 = vpop.f32.mrf.mxu0
  %v1452 = vadd.f32 0.0, %v1451
  %v1453 = vpop.f32.mrf.mxu0
  %v1454 = vpop.f32.mrf.mxu0
  %v1455 = vadd.f32 0.0, %v1454
  %v1456 = vpop.f32.mrf.mxu0
  %1457 = vmatprep.mubr.bf16.mxu0 0
  %1458 = vmatmul.mubr.bf16.gmra.mxu0 %v1302
  %v1459 = vpop.f32.mrf.mxu0
  %v1460 = vadd.f32 0.0, %v1459
  %v1461 = vpop.f32.mrf.mxu0
  %v1462 = vpop.f32.mrf.mxu0
  %v1463 = vadd.f32 0.0, %v1462
  %v1464 = vpop.f32.mrf.mxu0
  %1465 = vmatprep.mubr.bf16.mxu0 0
  %1466 = vmatmul.mubr.bf16.gmra.mxu0 %v1305
  %v1467 = vpop.f32.mrf.mxu0
  %v1468 = vadd.f32 0.0, %v1467
  %v1469 = vpop.f32.mrf.mxu0
  %v1470 = vpop.f32.mrf.mxu0
  %v1471 = vadd.f32 0.0, %v1470
  %v1472 = vpop.f32.mrf.mxu0
  %1473 = vmatprep.mubr.bf16.mxu0 0
  %1474 = vmatmul.mubr.bf16.gmra.mxu0 %v1308
  %v1475 = vpop.f32.mrf.mxu0
  %v1476 = vadd.f32 0.0, %v1475
  %v1477 = vpop.f32.mrf.mxu0
  %v1478 = vpop.f32.mrf.mxu0
  %v1479 = vadd.f32 0.0, %v1478
  %v1480 = vpop.f32.mrf.mxu0
  %1481 = vmatprep.mubr.bf16.mxu0 0
  %1482 = vmatmul.mubr.bf16.gmra.mxu0 %v1311
  %v1483 = vpop.f32.mrf.mxu0
  %v1484 = vadd.f32 0.0, %v1483
  %v1485 = vpop.f32.mrf.mxu0
  %v1486 = vpop.f32.mrf.mxu0
  %v1487 = vadd.f32 0.0, %v1486
  %v1488 = vpop.f32.mrf.mxu0
  %1489 = vmatprep.mubr.bf16.mxu0 0
  %1490 = vmatmul.mubr.bf16.gmra.mxu0 %v1314
  %v1491 = vpop.f32.mrf.mxu0
  %v1492 = vadd.f32 0.0, %v1491
  %v1493 = vpop.f32.mrf.mxu0
  %v1494 = vpop.f32.mrf.mxu0
  %v1495 = vadd.f32 0.0, %v1494
  %v1496 = vpop.f32.mrf.mxu0
  %1497 = vmatprep.mubr.bf16.mxu0 0
  %1498 = vmatmul.mubr.bf16.gmra.mxu0 %v1317
  %v1499 = vpop.f32.mrf.mxu0
  %v1500 = vadd.f32 0.0, %v1499
  %v1501 = vpop.f32.mrf.mxu0
  %v1502 = vpop.f32.mrf.mxu0
  %v1503 = vadd.f32 0.0, %v1502
  %v1504 = vpop.f32.mrf.mxu0
  %1505 = vmatprep.mubr.bf16.mxu0 0
  %1506 = vmatmul.mubr.bf16.gmra.mxu0 %v1320
  %v1507 = vpop.f32.mrf.mxu0
  %v1508 = vadd.f32 0.0, %v1507
  %v1509 = vpop.f32.mrf.mxu0
  %v1510 = vpop.f32.mrf.mxu0
  %v1511 = vadd.f32 0.0, %v1510
  %v1512 = vpop.f32.mrf.mxu0
  %1513 = vmatprep.mubr.bf16.mxu0 0
  %1514 = vmatmul.mubr.bf16.gmra.mxu0 %v1323
  %v1515 = vpop.f32.mrf.mxu0
  %v1516 = vadd.f32 0.0, %v1515
  %v1517 = vpop.f32.mrf.mxu0
  %v1518 = vpop.f32.mrf.mxu0
  %v1519 = vadd.f32 0.0, %v1518
  %v1520 = vpop.f32.mrf.mxu0
  %1521 = vmatprep.mubr.bf16.mxu0 0
  %1522 = vmatmul.mubr.bf16.gmra.mxu0 %v1326
  %v1523 = vpop.f32.mrf.mxu0
  %v1524 = vadd.f32 0.0, %v1523
  %v1525 = vpop.f32.mrf.mxu0
  %v1526 = vpop.f32.mrf.mxu0
  %v1527 = vadd.f32 0.0, %v1526
  %v1528 = vpop.f32.mrf.mxu0
  %1529 = vmatprep.mubr.bf16.mxu0 0
  %1530 = vmatmul.mubr.bf16.gmra.mxu0 %v1329
  %v1531 = vpop.f32.mrf.mxu0
  %v1532 = vadd.f32 0.0, %v1531
  %v1533 = vpop.f32.mrf.mxu0
  %v1534 = vpop.f32.mrf.mxu0
  %v1535 = vadd.f32 0.0, %v1534
  %v1536 = vpop.f32.mrf.mxu0
  %1537 = vmatprep.mubr.bf16.mxu0 0
  %1538 = vmatmul.mubr.bf16.gmra.mxu0 %v1332
  %v1539 = vpop.f32.mrf.mxu0
  %v1540 = vadd.f32 0.0, %v1539
  %v1541 = vpop.f32.mrf.mxu0
  %v1542 = vpop.f32.mrf.mxu0
  %v1543 = vadd.f32 0.0, %v1542
  %v1544 = vpop.f32.mrf.mxu0
  %1545 = vmatprep.mubr.bf16.mxu0 0
  %1546 = vmatmul.mubr.bf16.gmra.mxu0 %v1335
  %v1547 = vpop.f32.mrf.mxu0
  %v1548 = vadd.f32 0.0, %v1547
  %v1549 = vpop.f32.mrf.mxu0
  %v1550 = vpop.f32.mrf.mxu0
  %v1551 = vadd.f32 0.0, %v1550
  %v1552 = vpop.f32.mrf.mxu0
  %1553 = vmatprep.mubr.bf16.mxu0 0
  %1554 = vmatmul.mubr.bf16.gmra.mxu0 %v1338
  %v1555 = vpop.f32.mrf.mxu0
  %v1556 = vadd.f32 0.0, %v1555
  %v1557 = vpop.f32.mrf.mxu0
  %v1558 = vpop.f32.mrf.mxu0
  %v1559 = vadd.f32 0.0, %v1558
  %v1560 = vpop.f32.mrf.mxu0
  %1561 = vmatprep.mubr.bf16.mxu0 0
  %1562 = vmatmul.mubr.bf16.gmra.mxu0 %v1341
  %v1563 = vpop.f32.mrf.mxu0
  %v1564 = vadd.f32 0.0, %v1563
  %v1565 = vpop.f32.mrf.mxu0
  %v1566 = vpop.f32.mrf.mxu0
  %v1567 = vadd.f32 0.0, %v1566
  %v1568 = vpop.f32.mrf.mxu0
  %1569 = vmatprep.mubr.bf16.mxu0 0
  %1570 = vmatmul.mubr.bf16.gmra.mxu0 %v1344
  %v1571 = vpop.f32.mrf.mxu0
  %v1572 = vadd.f32 0.0, %v1571
  %v1573 = vpop.f32.mrf.mxu0
  %v1574 = vpop.f32.mrf.mxu0
  %v1575 = vadd.f32 0.0, %v1574
  %v1576 = vpop.f32.mrf.mxu0
  %1577 = vmatprep.mubr.bf16.mxu0 0
  %1578 = vmatmul.mubr.bf16.gmra.mxu0 %v1347
  %v1579 = vpop.f32.mrf.mxu0
  %v1580 = vadd.f32 0.0, %v1579
  %v1581 = vpop.f32.mrf.mxu0
  %v1582 = vpop.f32.mrf.mxu0
  %v1583 = vadd.f32 0.0, %v1582
  %v1584 = vpop.f32.mrf.mxu0
  %1585 = vmatprep.mubr.bf16.mxu0 0
  %1586 = vmatmul.mubr.bf16.gmra.mxu0 %v1350
  %v1587 = vpop.f32.mrf.mxu0
  %v1588 = vadd.f32 0.0, %v1587
  %v1589 = vpop.f32.mrf.mxu0
  %v1590 = vpop.f32.mrf.mxu0
  %v1591 = vadd.f32 0.0, %v1590
  %v1592 = vpop.f32.mrf.mxu0
  %1593 = vmatprep.mubr.bf16.mxu0 0
  %1594 = vmatmul.mubr.bf16.gmra.mxu0 %v1353
  %v1595 = vpop.f32.mrf.mxu0
  %v1596 = vadd.f32 0.0, %v1595
  %v1597 = vpop.f32.mrf.mxu0
  %v1598 = vpop.f32.mrf.mxu0
  %v1599 = vadd.f32 0.0, %v1598
  %v1600 = vpop.f32.mrf.mxu0
  %1601 = vmatprep.mubr.bf16.mxu0 0
  %1602 = vmatmul.mubr.bf16.gmra.mxu0 %v1356
  %v1603 = vpop.f32.mrf.mxu0
  %v1604 = vadd.f32 0.0, %v1603
  %v1605 = vpop.f32.mrf.mxu0
  %v1606 = vpop.f32.mrf.mxu0
  %v1607 = vadd.f32 0.0, %v1606
  %v1608 = vpop.f32.mrf.mxu0
  %1609 = vmatprep.mubr.bf16.mxu0 0
  %1610 = vmatmul.mubr.bf16.gmra.mxu0 %v1359
  %v1611 = vpop.f32.mrf.mxu0
  %v1612 = vadd.f32 0.0, %v1611
  %v1613 = vpop.f32.mrf.mxu0
  %v1614 = vpop.f32.mrf.mxu0
  %v1615 = vadd.f32 0.0, %v1614
  %v1616 = vpop.f32.mrf.mxu0
  %1617 = vmatprep.mubr.bf16.mxu0 0
  %1618 = vmatmul.mubr.bf16.gmra.mxu0 %v1362
  %v1619 = vpop.f32.mrf.mxu0
  %v1620 = vadd.f32 0.0, %v1619
  %v1621 = vpop.f32.mrf.mxu0
  %v1622 = vpop.f32.mrf.mxu0
  %v1623 = vadd.f32 0.0, %v1622
  %v1624 = vpop.f32.mrf.mxu0
  %1625 = vmatprep.mubr.bf16.mxu0 0
  %1626 = vmatmul.mubr.bf16.gmra.mxu0 %v1365
  %v1627 = vpop.f32.mrf.mxu0
  %v1628 = vadd.f32 0.0, %v1627
  %v1629 = vpop.f32.mrf.mxu0
  %v1630 = vpop.f32.mrf.mxu0
  %v1631 = vadd.f32 0.0, %v1630
  %v1632 = vpop.f32.mrf.mxu0
  %1633 = vmatprep.mubr.bf16.mxu0 0
  %1634 = vmatmul.mubr.bf16.gmra.mxu0 %v1368
  %v1635 = vpop.f32.mrf.mxu0
  %v1636 = vadd.f32 0.0, %v1635
  %v1637 = vpop.f32.mrf.mxu0
  %v1638 = vpop.f32.mrf.mxu0
  %v1639 = vadd.f32 0.0, %v1638
  %v1640 = vpop.f32.mrf.mxu0
  %1641 = vmatprep.mubr.bf16.mxu0 0
  %1642 = vmatmul.mubr.bf16.gmra.mxu0 %v1371
  %v1643 = vpop.f32.mrf.mxu0
  %v1644 = vadd.f32 0.0, %v1643
  %v1645 = vpop.f32.mrf.mxu0
  %v1646 = vpop.f32.mrf.mxu0
  %v1647 = vadd.f32 0.0, %v1646
  %v1648 = vpop.f32.mrf.mxu0
  %1649 = vmatprep.mubr.bf16.mxu0 0
  %1650 = vmatmul.mubr.bf16.gmra.mxu0 %v1374
  %v1651 = vpop.f32.mrf.mxu0
  %v1652 = vadd.f32 0.0, %v1651
  %v1653 = vpop.f32.mrf.mxu0
  %v1654 = vpop.f32.mrf.mxu0
  %v1655 = vadd.f32 0.0, %v1654
  %v1656 = vpop.f32.mrf.mxu0
  %1657 = vmatprep.mubr.bf16.mxu0 0
  %1658 = vmatmul.mubr.bf16.gmra.mxu0 %v1377
  %v1659 = vpop.f32.mrf.mxu0
  %v1660 = vadd.f32 0.0, %v1659
  %v1661 = vpop.f32.mrf.mxu0
  %v1662 = vpop.f32.mrf.mxu0
  %v1663 = vadd.f32 0.0, %v1662
  %v1664 = vpop.f32.mrf.mxu0
  %1665 = vmatprep.mubr.bf16.mxu0 0
  %1666 = vmatmul.mubr.bf16.gmra.mxu0 %v1380
  %v1667 = vpop.f32.mrf.mxu0
  %v1668 = vadd.f32 0.0, %v1667
  %v1669 = vpop.f32.mrf.mxu0
  %v1670 = vpop.f32.mrf.mxu0
  %v1671 = vadd.f32 0.0, %v1670
  %v1672 = vpop.f32.mrf.mxu0
  %1673 = vdwg.mxu0
  %vm1674 = vcmask 130048
  %1675 = vst.msk [vmem:[%s12] sm:$0xff] %vm1674, %v1420
  %1676 = vst.msk [vmem:[%s12 + $0x8] sm:$0xff] %vm1674, %v1423
  %1677 = vst.msk [vmem:[%s12 + $0x10] sm:$0xff] %vm1674, %v1428
  %1678 = vst.msk [vmem:[%s12 + $0x18] sm:$0xff] %vm1674, %v1431
  %1679 = vst.msk [vmem:[%s12 + $0x20] sm:$0xff] %vm1674, %v1436
  %1680 = vst.msk [vmem:[%s12 + $0x28] sm:$0xff] %vm1674, %v1439
  %1681 = vst.msk [vmem:[%s12 + $0x30] sm:$0xff] %vm1674, %v1444
  %1682 = vst.msk [vmem:[%s12 + $0x38] sm:$0xff] %vm1674, %v1447
  %1683 = vst.msk [vmem:[%s12 + $0x40] sm:$0xff] %vm1674, %v1452
  %1684 = vst.msk [vmem:[%s12 + $0x48] sm:$0xff] %vm1674, %v1455
  %1685 = vst.msk [vmem:[%s12 + $0x50] sm:$0xff] %vm1674, %v1460
  %1686 = vst.msk [vmem:[%s12 + $0x58] sm:$0xff] %vm1674, %v1463
  %1687 = vst.msk [vmem:[%s12 + $0x60] sm:$0xff] %vm1674, %v1468
  %1688 = vst.msk [vmem:[%s12 + $0x68] sm:$0xff] %vm1674, %v1471
  %1689 = vst.msk [vmem:[%s12 + $0x70] sm:$0xff] %vm1674, %v1476
  %1690 = vst.msk [vmem:[%s12 + $0x78] sm:$0xff] %vm1674, %v1479
  %1691 = vst.msk [vmem:[%s12 + $0x80] sm:$0xff] %vm1674, %v1484
  %1692 = vst.msk [vmem:[%s12 + $0x88] sm:$0xff] %vm1674, %v1487
  %1693 = vst.msk [vmem:[%s12 + $0x90] sm:$0xff] %vm1674, %v1492
  %1694 = vst.msk [vmem:[%s12 + $0x98] sm:$0xff] %vm1674, %v1495
  %1695 = vst.msk [vmem:[%s12 + $0xa0] sm:$0xff] %vm1674, %v1500
  %1696 = vst.msk [vmem:[%s12 + $0xa8] sm:$0xff] %vm1674, %v1503
  %1697 = vst.msk [vmem:[%s12 + $0xb0] sm:$0xff] %vm1674, %v1508
  %1698 = vst.msk [vmem:[%s12 + $0xb8] sm:$0xff] %vm1674, %v1511
  %1699 = vst.msk [vmem:[%s12 + $0xc0] sm:$0xff] %vm1674, %v1516
  %1700 = vst.msk [vmem:[%s12 + $0xc8] sm:$0xff] %vm1674, %v1519
  %1701 = vst.msk [vmem:[%s12 + $0xd0] sm:$0xff] %vm1674, %v1524
  %1702 = vst.msk [vmem:[%s12 + $0xd8] sm:$0xff] %vm1674, %v1527
  %1703 = vst.msk [vmem:[%s12 + $0xe0] sm:$0xff] %vm1674, %v1532
  %1704 = vst.msk [vmem:[%s12 + $0xe8] sm:$0xff] %vm1674, %v1535
  %1705 = vst.msk [vmem:[%s12 + $0xf0] sm:$0xff] %vm1674, %v1540
  %1706 = vst.msk [vmem:[%s12 + $0xf8] sm:$0xff] %vm1674, %v1543
  %1707 = vst.msk [vmem:[%s12 + $0x100] sm:$0xff] %vm1674, %v1548
  %1708 = vst.msk [vmem:[%s12 + $0x108] sm:$0xff] %vm1674, %v1551
  %1709 = vst.msk [vmem:[%s12 + $0x110] sm:$0xff] %vm1674, %v1556
  %1710 = vst.msk [vmem:[%s12 + $0x118] sm:$0xff] %vm1674, %v1559
  %1711 = vst.msk [vmem:[%s12 + $0x120] sm:$0xff] %vm1674, %v1564
  %1712 = vst.msk [vmem:[%s12 + $0x128] sm:$0xff] %vm1674, %v1567
  %1713 = vst.msk [vmem:[%s12 + $0x130] sm:$0xff] %vm1674, %v1572
  %1714 = vst.msk [vmem:[%s12 + $0x138] sm:$0xff] %vm1674, %v1575
  %1715 = vst.msk [vmem:[%s12 + $0x140] sm:$0xff] %vm1674, %v1580
  %1716 = vst.msk [vmem:[%s12 + $0x148] sm:$0xff] %vm1674, %v1583
  %1717 = vst.msk [vmem:[%s12 + $0x150] sm:$0xff] %vm1674, %v1588
  %1718 = vst.msk [vmem:[%s12 + $0x158] sm:$0xff] %vm1674, %v1591
  %1719 = vst.msk [vmem:[%s12 + $0x160] sm:$0xff] %vm1674, %v1596
  %1720 = vst.msk [vmem:[%s12 + $0x168] sm:$0xff] %vm1674, %v1599
  %1721 = vst.msk [vmem:[%s12 + $0x170] sm:$0xff] %vm1674, %v1604
  %1722 = vst.msk [vmem:[%s12 + $0x178] sm:$0xff] %vm1674, %v1607
  %1723 = vst.msk [vmem:[%s12 + $0x180] sm:$0xff] %vm1674, %v1612
  %1724 = vst.msk [vmem:[%s12 + $0x188] sm:$0xff] %vm1674, %v1615
  %1725 = vst.msk [vmem:[%s12 + $0x190] sm:$0xff] %vm1674, %v1620
  %1726 = vst.msk [vmem:[%s12 + $0x198] sm:$0xff] %vm1674, %v1623
  %1727 = vst.msk [vmem:[%s12 + $0x1a0] sm:$0xff] %vm1674, %v1628
  %1728 = vst.msk [vmem:[%s12 + $0x1a8] sm:$0xff] %vm1674, %v1631
  %1729 = vst.msk [vmem:[%s12 + $0x1b0] sm:$0xff] %vm1674, %v1636
  %1730 = vst.msk [vmem:[%s12 + $0x1b8] sm:$0xff] %vm1674, %v1639
  %1731 = vst.msk [vmem:[%s12 + $0x1c0] sm:$0xff] %vm1674, %v1644
  %1732 = vst.msk [vmem:[%s12 + $0x1c8] sm:$0xff] %vm1674, %v1647
  %1733 = vst.msk [vmem:[%s12 + $0x1d0] sm:$0xff] %vm1674, %v1652
  %1734 = vst.msk [vmem:[%s12 + $0x1d8] sm:$0xff] %vm1674, %v1655
  %1735 = vst.msk [vmem:[%s12 + $0x1e0] sm:$0xff] %vm1674, %v1660
  %1736 = vst.msk [vmem:[%s12 + $0x1e8] sm:$0xff] %vm1674, %v1663
  %1737 = vst.msk [vmem:[%s12 + $0x1f0] sm:$0xff] %vm1674, %v1668
  %1738 = vst.msk [vmem:[%s12 + $0x1f8] sm:$0xff] %vm1674, %v1671
  %v1739 = vld [vmem:[%s1] sm:$0xf]
  %v1740 = vld [vmem:[%s1 + $0x4] sm:$0xf]
  %v1741 = vld [vmem:[%s1 + $0x8] sm:$0xf]
  %v1742 = vld [vmem:[%s1 + $0xc] sm:$0xf]
  %v1743 = vld [vmem:[%s1 + $0x10] sm:$0xf]
  %v1744 = vld [vmem:[%s1 + $0x14] sm:$0xf]
  %v1745 = vld [vmem:[%s1 + $0x18] sm:$0xf]
  %v1746 = vld [vmem:[%s1 + $0x1c] sm:$0xf]
  %v1747 = vld [vmem:[%s1 + $0x20] sm:$0xf]
  %v1748 = vld [vmem:[%s1 + $0x24] sm:$0xf]
  %v1749 = vld [vmem:[%s1 + $0x28] sm:$0xf]
  %v1750 = vld [vmem:[%s1 + $0x2c] sm:$0xf]
  %v1751 = vld [vmem:[%s1 + $0x30] sm:$0xf]
  %v1752 = vld [vmem:[%s1 + $0x34] sm:$0xf]
  %v1753 = vld [vmem:[%s1 + $0x38] sm:$0xf]
  %v1754 = vld [vmem:[%s1 + $0x3c] sm:$0xf]
  %s1755 = scalar_lea.vmem %s4, 4
  %v1756 = vld [vmem:[%s1755] sm:$0xf]
  %s1757 = scalar_lea.vmem %s5, 1
  %v1758 = vld [vmem:[%s1757] sm:$0x1]
  %v1760 = vlaneseq
  %v1761 = vshrl.u32 %v1760, 7
  %v1762 = vsub.s32 0, %v1761
  %v1763 = vrot.slane %v1758, %v1762
  %v1781 = vunpack.c.l.b16 %v1739
  %v1782 = vunpack.c.l.b16 %v1740
  %v1783 = vunpack.c.l.b16 %v1741
  %v1784 = vunpack.c.l.b16 %v1742
  %v1785 = vunpack.c.l.b16 %v1743
  %v1786 = vunpack.c.l.b16 %v1744
  %v1787 = vunpack.c.l.b16 %v1745
  %v1788 = vunpack.c.l.b16 %v1746
  %v1789 = vunpack.c.l.b16 %v1747
  %v1790 = vunpack.c.l.b16 %v1748
  %v1791 = vunpack.c.l.b16 %v1749
  %v1792 = vunpack.c.l.b16 %v1750
  %v1793 = vunpack.c.l.b16 %v1751
  %v1794 = vunpack.c.l.b16 %v1752
  %v1795 = vunpack.c.l.b16 %v1753
  %v1796 = vunpack.c.l.b16 %v1754
  %v1797 = vpack.c.b16 %v1782, %v1781
  %v1798 = vpack.c.b16 %v1784, %v1783
  %v1799 = vpack.c.b16 %v1786, %v1785
  %v1800 = vpack.c.b16 %v1788, %v1787
  %v1801 = vpack.c.b16 %v1790, %v1789
  %v1802 = vpack.c.b16 %v1792, %v1791
  %v1803 = vpack.c.b16 %v1794, %v1793
  %v1804 = vpack.c.b16 %v1796, %v1795
  %v1806 = vsel %vm278, %v1797, 0
  %v1809 = vsel %vm278, %v1798, 0
  %v1812 = vsel %vm278, %v1799, 0
  %v1815 = vsel %vm278, %v1800, 0
  %v1818 = vsel %vm278, %v1801, 0
  %v1821 = vsel %vm278, %v1802, 0
  %v1824 = vsel %vm278, %v1803, 0
  %v1827 = vsel %vm278, %v1804, 0
  %v1830 = vsel %vm375, %v1756, 0
  %1832 = vmatprep.subr.bf16.mxu0 0
  %1833 = vmatpush1.bf16.msra.mxu0 0
  %1834 = vmatprep.subr.bf16.mxu0 0
  %1835 = vmatpush1.bf16.msra.mxu0 0
  %1836 = vmatprep.subr.bf16.mxu0 0
  %1837 = vmatpush1.bf16.msra.mxu0 0
  %1838 = vmatprep.subr.bf16.mxu0 0
  %1839 = vmatpush1.bf16.msra.mxu0 0
  %1840 = vmatprep.subr.bf16.mxu0 0
  %1841 = vmatpush1.bf16.msra.mxu0 0
  %1842 = vmatprep.subr.bf16.mxu0 0
  %1843 = vmatpush1.bf16.msra.mxu0 0
  %1844 = vmatprep.subr.bf16.mxu0 0
  %1845 = vmatpush1.bf16.msra.mxu0 0
  %1846 = vmatprep.subr.bf16.mxu0 0
  %1847 = vmatpush1.bf16.msra.mxu0 %v1830
  %1848 = vmatprep.subr.bf16.mxu0 0
  %1849 = vmatpush2.bf16.msra.mxu0 0
  %1850 = vmatprep.subr.bf16.mxu0 0
  %1851 = vmatpush2.bf16.msra.mxu0 0
  %1852 = vmatprep.subr.bf16.mxu0 0
  %1853 = vmatpush2.bf16.msra.mxu0 0
  %1854 = vmatprep.subr.bf16.mxu0 0
  %1855 = vmatpush2.bf16.msra.mxu0 0
  %1856 = vmatprep.subr.bf16.mxu0 0
  %1857 = vmatpush2.bf16.msra.mxu0 0
  %1858 = vmatprep.subr.bf16.mxu0 0
  %1859 = vmatpush2.bf16.msra.mxu0 0
  %1860 = vmatprep.subr.bf16.mxu0 0
  %1861 = vmatpush2.bf16.msra.mxu0 0
  %1862 = vmatprep.subr.bf16.mxu0 0
  %1863 = vmatpush2.bf16.msra.mxu0 0
  %1864 = vmatprep.mubr.bf16.mxu0 0
  %1865 = vmatmul.mubr.bf16.gmra.mxu0 %v1806
  %v1866 = vpop.f32.mrf.mxu0
  %v1867 = vadd.f32 %v1763, %v1866
  %v1868 = vpop.f32.mrf.mxu0
  %v1869 = vpop.f32.mrf.mxu0
  %v1870 = vadd.f32 %v1763, %v1869
  %v1871 = vpop.f32.mrf.mxu0
  %1872 = vmatprep.mubr.bf16.mxu0 0
  %1873 = vmatmul.mubr.bf16.gmra.mxu0 %v1809
  %v1874 = vpop.f32.mrf.mxu0
  %v1875 = vadd.f32 %v1763, %v1874
  %v1876 = vpop.f32.mrf.mxu0
  %v1877 = vpop.f32.mrf.mxu0
  %v1878 = vadd.f32 %v1763, %v1877
  %v1879 = vpop.f32.mrf.mxu0
  %1880 = vmatprep.mubr.bf16.mxu0 0
  %1881 = vmatmul.mubr.bf16.gmra.mxu0 %v1812
  %v1882 = vpop.f32.mrf.mxu0
  %v1883 = vadd.f32 %v1763, %v1882
  %v1884 = vpop.f32.mrf.mxu0
  %v1885 = vpop.f32.mrf.mxu0
  %v1886 = vadd.f32 %v1763, %v1885
  %v1887 = vpop.f32.mrf.mxu0
  %1888 = vmatprep.mubr.bf16.mxu0 0
  %1889 = vmatmul.mubr.bf16.gmra.mxu0 %v1815
  %v1890 = vpop.f32.mrf.mxu0
  %v1891 = vadd.f32 %v1763, %v1890
  %v1892 = vpop.f32.mrf.mxu0
  %v1893 = vpop.f32.mrf.mxu0
  %v1894 = vadd.f32 %v1763, %v1893
  %v1895 = vpop.f32.mrf.mxu0
  %1896 = vmatprep.mubr.bf16.mxu0 0
  %1897 = vmatmul.mubr.bf16.gmra.mxu0 %v1818
  %v1898 = vpop.f32.mrf.mxu0
  %v1899 = vadd.f32 %v1763, %v1898
  %v1900 = vpop.f32.mrf.mxu0
  %v1901 = vpop.f32.mrf.mxu0
  %v1902 = vadd.f32 %v1763, %v1901
  %v1903 = vpop.f32.mrf.mxu0
  %1904 = vmatprep.mubr.bf16.mxu0 0
  %1905 = vmatmul.mubr.bf16.gmra.mxu0 %v1821
  %v1906 = vpop.f32.mrf.mxu0
  %v1907 = vadd.f32 %v1763, %v1906
  %v1908 = vpop.f32.mrf.mxu0
  %v1909 = vpop.f32.mrf.mxu0
  %v1910 = vadd.f32 %v1763, %v1909
  %v1911 = vpop.f32.mrf.mxu0
  %1912 = vmatprep.mubr.bf16.mxu0 0
  %1913 = vmatmul.mubr.bf16.gmra.mxu0 %v1824
  %v1914 = vpop.f32.mrf.mxu0
  %v1915 = vadd.f32 %v1763, %v1914
  %v1916 = vpop.f32.mrf.mxu0
  %v1917 = vpop.f32.mrf.mxu0
  %v1918 = vadd.f32 %v1763, %v1917
  %v1919 = vpop.f32.mrf.mxu0
  %1920 = vmatprep.mubr.bf16.mxu0 0
  %1921 = vmatmul.mubr.bf16.gmra.mxu0 %v1827
  %v1922 = vpop.f32.mrf.mxu0
  %v1923 = vadd.f32 %v1763, %v1922
  %v1924 = vpop.f32.mrf.mxu0
  %v1925 = vpop.f32.mrf.mxu0
  %v1926 = vadd.f32 %v1763, %v1925
  %v1927 = vpop.f32.mrf.mxu0
  %1928 = vdwg.mxu0
  %v1929 = vmax.f32 %v1867, 0.0
  %v1930 = vmax.f32 %v1870, 0.0
  %v1931 = vmax.f32 %v1875, 0.0
  %v1932 = vmax.f32 %v1878, 0.0
  %v1933 = vmax.f32 %v1883, 0.0
  %v1934 = vmax.f32 %v1886, 0.0
  %v1935 = vmax.f32 %v1891, 0.0
  %v1936 = vmax.f32 %v1894, 0.0
  %v1937 = vmax.f32 %v1899, 0.0
  %v1938 = vmax.f32 %v1902, 0.0
  %v1939 = vmax.f32 %v1907, 0.0
  %v1940 = vmax.f32 %v1910, 0.0
  %v1941 = vmax.f32 %v1915, 0.0
  %v1942 = vmax.f32 %v1918, 0.0
  %v1943 = vmax.f32 %v1923, 0.0
  %v1944 = vmax.f32 %v1926, 0.0
  %v1945 = vpack.c.bf16 %v1930, %v1929
  %v1946 = vpack.c.bf16 %v1932, %v1931
  %v1947 = vpack.c.bf16 %v1934, %v1933
  %v1948 = vpack.c.bf16 %v1936, %v1935
  %v1949 = vpack.c.bf16 %v1938, %v1937
  %v1950 = vpack.c.bf16 %v1940, %v1939
  %v1951 = vpack.c.bf16 %v1942, %v1941
  %v1952 = vpack.c.bf16 %v1944, %v1943
  %s1953 = scalar_lea.vmem %s6, 32
  %v1954 = vld [vmem:[%s1953] sm:$0xf]
  %v1955 = vld [vmem:[%s1953 + $0x4] sm:$0xf]
  %v1956 = vld [vmem:[%s1953 + $0x8] sm:$0xf]
  %v1957 = vld [vmem:[%s1953 + $0xc] sm:$0xf]
  %v1958 = vld [vmem:[%s1953 + $0x10] sm:$0xf]
  %v1959 = vld [vmem:[%s1953 + $0x14] sm:$0xf]
  %v1960 = vld [vmem:[%s1953 + $0x18] sm:$0xf]
  %v1961 = vld [vmem:[%s1953 + $0x1c] sm:$0xf]
  %s1962 = scalar_lea.vmem %s7, 1
  %v1963 = vld [vmem:[%s1962] sm:$0x1]
  %v1965 = vlaneseq
  %v1966 = vshrl.u32 %v1965, 7
  %v1967 = vsub.s32 0, %v1966
  %v1968 = vrot.slane %v1963, %v1967
  %v1978 = vunpack.c.l.b16 %v1954
  %v1979 = vunpack.c.l.b16 %v1955
  %v1980 = vunpack.c.l.b16 %v1956
  %v1981 = vunpack.c.l.b16 %v1957
  %v1982 = vunpack.c.l.b16 %v1958
  %v1983 = vunpack.c.l.b16 %v1959
  %v1984 = vunpack.c.l.b16 %v1960
  %v1985 = vunpack.c.l.b16 %v1961
  %v1986 = vpack.c.b16 %v1979, %v1978
  %v1987 = vpack.c.b16 %v1981, %v1980
  %v1988 = vpack.c.b16 %v1983, %v1982
  %v1989 = vpack.c.b16 %v1985, %v1984
  %v1995 = vsel %vm803, %v1945, 0
  %v1998 = vsel %vm803, %v1946, 0
  %v2001 = vsel %vm803, %v1947, 0
  %v2004 = vsel %vm803, %v1948, 0
  %v2007 = vsel %vm803, %v1949, 0
  %v2010 = vsel %vm803, %v1950, 0
  %v2013 = vsel %vm803, %v1951, 0
  %v2016 = vsel %vm803, %v1952, 0
  %2018 = vmatprep.subr.bf16.mxu0 0
  %2019 = vmatpush1.bf16.msra.mxu0 0
  %2020 = vmatprep.subr.bf16.mxu0 0
  %2021 = vmatpush1.bf16.msra.mxu0 0
  %2022 = vmatprep.subr.bf16.mxu0 0
  %2023 = vmatpush1.bf16.msra.mxu0 0
  %2024 = vmatprep.subr.bf16.mxu0 0
  %2025 = vmatpush1.bf16.msra.mxu0 0
  %2026 = vmatprep.subr.bf16.mxu0 0
  %2027 = vmatpush1.bf16.msra.mxu0 %v1989
  %2028 = vmatprep.subr.bf16.mxu0 0
  %2029 = vmatpush1.bf16.msra.mxu0 %v1988
  %2030 = vmatprep.subr.bf16.mxu0 0
  %2031 = vmatpush1.bf16.msra.mxu0 %v1987
  %2032 = vmatprep.subr.bf16.mxu0 0
  %2033 = vmatpush1.bf16.msra.mxu0 %v1986
  %2034 = vmatprep.subr.bf16.mxu0 0
  %2035 = vmatpush2.bf16.msra.mxu0 0
  %2036 = vmatprep.subr.bf16.mxu0 0
  %2037 = vmatpush2.bf16.msra.mxu0 0
  %2038 = vmatprep.subr.bf16.mxu0 0
  %2039 = vmatpush2.bf16.msra.mxu0 0
  %2040 = vmatprep.subr.bf16.mxu0 0
  %2041 = vmatpush2.bf16.msra.mxu0 0
  %2042 = vmatprep.subr.bf16.mxu0 0
  %2043 = vmatpush2.bf16.msra.mxu0 0
  %2044 = vmatprep.subr.bf16.mxu0 0
  %2045 = vmatpush2.bf16.msra.mxu0 0
  %2046 = vmatprep.subr.bf16.mxu0 0
  %2047 = vmatpush2.bf16.msra.mxu0 0
  %2048 = vmatprep.subr.bf16.mxu0 0
  %2049 = vmatpush2.bf16.msra.mxu0 0
  %2050 = vmatprep.mubr.bf16.mxu0 0
  %2051 = vmatmul.mubr.bf16.gmra.mxu0 %v1995
  %v2052 = vpop.f32.mrf.mxu0
  %v2053 = vadd.f32 %v1968, %v2052
  %v2054 = vpop.f32.mrf.mxu0
  %v2055 = vpop.f32.mrf.mxu0
  %v2056 = vadd.f32 %v1968, %v2055
  %v2057 = vpop.f32.mrf.mxu0
  %2058 = vmatprep.mubr.bf16.mxu0 0
  %2059 = vmatmul.mubr.bf16.gmra.mxu0 %v1998
  %v2060 = vpop.f32.mrf.mxu0
  %v2061 = vadd.f32 %v1968, %v2060
  %v2062 = vpop.f32.mrf.mxu0
  %v2063 = vpop.f32.mrf.mxu0
  %v2064 = vadd.f32 %v1968, %v2063
  %v2065 = vpop.f32.mrf.mxu0
  %2066 = vmatprep.mubr.bf16.mxu0 0
  %2067 = vmatmul.mubr.bf16.gmra.mxu0 %v2001
  %v2068 = vpop.f32.mrf.mxu0
  %v2069 = vadd.f32 %v1968, %v2068
  %v2070 = vpop.f32.mrf.mxu0
  %v2071 = vpop.f32.mrf.mxu0
  %v2072 = vadd.f32 %v1968, %v2071
  %v2073 = vpop.f32.mrf.mxu0
  %2074 = vmatprep.mubr.bf16.mxu0 0
  %2075 = vmatmul.mubr.bf16.gmra.mxu0 %v2004
  %v2076 = vpop.f32.mrf.mxu0
  %v2077 = vadd.f32 %v1968, %v2076
  %v2078 = vpop.f32.mrf.mxu0
  %v2079 = vpop.f32.mrf.mxu0
  %v2080 = vadd.f32 %v1968, %v2079
  %v2081 = vpop.f32.mrf.mxu0
  %2082 = vmatprep.mubr.bf16.mxu0 0
  %2083 = vmatmul.mubr.bf16.gmra.mxu0 %v2007
  %v2084 = vpop.f32.mrf.mxu0
  %v2085 = vadd.f32 %v1968, %v2084
  %v2086 = vpop.f32.mrf.mxu0
  %v2087 = vpop.f32.mrf.mxu0
  %v2088 = vadd.f32 %v1968, %v2087
  %v2089 = vpop.f32.mrf.mxu0
  %2090 = vmatprep.mubr.bf16.mxu0 0
  %2091 = vmatmul.mubr.bf16.gmra.mxu0 %v2010
  %v2092 = vpop.f32.mrf.mxu0
  %v2093 = vadd.f32 %v1968, %v2092
  %v2094 = vpop.f32.mrf.mxu0
  %v2095 = vpop.f32.mrf.mxu0
  %v2096 = vadd.f32 %v1968, %v2095
  %v2097 = vpop.f32.mrf.mxu0
  %2098 = vmatprep.mubr.bf16.mxu0 0
  %2099 = vmatmul.mubr.bf16.gmra.mxu0 %v2013
  %v2100 = vpop.f32.mrf.mxu0
  %v2101 = vadd.f32 %v1968, %v2100
  %v2102 = vpop.f32.mrf.mxu0
  %v2103 = vpop.f32.mrf.mxu0
  %v2104 = vadd.f32 %v1968, %v2103
  %v2105 = vpop.f32.mrf.mxu0
  %2106 = vmatprep.mubr.bf16.mxu0 0
  %2107 = vmatmul.mubr.bf16.gmra.mxu0 %v2016
  %v2108 = vpop.f32.mrf.mxu0
  %v2109 = vadd.f32 %v1968, %v2108
  %v2110 = vpop.f32.mrf.mxu0
  %v2111 = vpop.f32.mrf.mxu0
  %v2112 = vadd.f32 %v1968, %v2111
  %v2113 = vpop.f32.mrf.mxu0
  %2114 = vdwg.mxu0
  %v2115 = vmax.f32 %v2053, 0.0
  %v2116 = vmax.f32 %v2056, 0.0
  %v2117 = vmax.f32 %v2061, 0.0
  %v2118 = vmax.f32 %v2064, 0.0
  %v2119 = vmax.f32 %v2069, 0.0
  %v2120 = vmax.f32 %v2072, 0.0
  %v2121 = vmax.f32 %v2077, 0.0
  %v2122 = vmax.f32 %v2080, 0.0
  %v2123 = vmax.f32 %v2085, 0.0
  %v2124 = vmax.f32 %v2088, 0.0
  %v2125 = vmax.f32 %v2093, 0.0
  %v2126 = vmax.f32 %v2096, 0.0
  %v2127 = vmax.f32 %v2101, 0.0
  %v2128 = vmax.f32 %v2104, 0.0
  %v2129 = vmax.f32 %v2109, 0.0
  %v2130 = vmax.f32 %v2112, 0.0
  %v2131 = vpack.c.bf16 %v2116, %v2115
  %v2132 = vpack.c.bf16 %v2118, %v2117
  %v2133 = vpack.c.bf16 %v2120, %v2119
  %v2134 = vpack.c.bf16 %v2122, %v2121
  %v2135 = vpack.c.bf16 %v2124, %v2123
  %v2136 = vpack.c.bf16 %v2126, %v2125
  %v2137 = vpack.c.bf16 %v2128, %v2127
  %v2138 = vpack.c.bf16 %v2130, %v2129
  %v2139 = vld [vmem:[%s9] sm:$0xf]
  %v2141 = vsel %vm278, %v2131, 0
  %v2144 = vsel %vm278, %v2132, 0
  %v2147 = vsel %vm278, %v2133, 0
  %v2150 = vsel %vm278, %v2134, 0
  %v2153 = vsel %vm278, %v2135, 0
  %v2156 = vsel %vm278, %v2136, 0
  %v2159 = vsel %vm278, %v2137, 0
  %v2162 = vsel %vm278, %v2138, 0
  %v2165 = vsel %vm375, %v2139, 0
  %2167 = vmatprep.subr.bf16.mxu0 0
  %2168 = vmatpush1.bf16.msra.mxu0 0
  %2169 = vmatprep.subr.bf16.mxu0 0
  %2170 = vmatpush1.bf16.msra.mxu0 0
  %2171 = vmatprep.subr.bf16.mxu0 0
  %2172 = vmatpush1.bf16.msra.mxu0 0
  %2173 = vmatprep.subr.bf16.mxu0 0
  %2174 = vmatpush1.bf16.msra.mxu0 0
  %2175 = vmatprep.subr.bf16.mxu0 0
  %2176 = vmatpush1.bf16.msra.mxu0 0
  %2177 = vmatprep.subr.bf16.mxu0 0
  %2178 = vmatpush1.bf16.msra.mxu0 0
  %2179 = vmatprep.subr.bf16.mxu0 0
  %2180 = vmatpush1.bf16.msra.mxu0 0
  %2181 = vmatprep.subr.bf16.mxu0 0
  %2182 = vmatpush1.bf16.msra.mxu0 %v2165
  %2183 = vmatprep.subr.bf16.mxu0 0
  %2184 = vmatpush2.bf16.msra.mxu0 0
  %2185 = vmatprep.subr.bf16.mxu0 0
  %2186 = vmatpush2.bf16.msra.mxu0 0
  %2187 = vmatprep.subr.bf16.mxu0 0
  %2188 = vmatpush2.bf16.msra.mxu0 0
  %2189 = vmatprep.subr.bf16.mxu0 0
  %2190 = vmatpush2.bf16.msra.mxu0 0
  %2191 = vmatprep.subr.bf16.mxu0 0
  %2192 = vmatpush2.bf16.msra.mxu0 0
  %2193 = vmatprep.subr.bf16.mxu0 0
  %2194 = vmatpush2.bf16.msra.mxu0 0
  %2195 = vmatprep.subr.bf16.mxu0 0
  %2196 = vmatpush2.bf16.msra.mxu0 0
  %2197 = vmatprep.subr.bf16.mxu0 0
  %2198 = vmatpush2.bf16.msra.mxu0 0
  %2199 = vmatprep.mubr.bf16.mxu0 0
  %2200 = vmatmul.mubr.bf16.gmra.mxu0 %v2141
  %v2201 = vpop.f32.mrf.mxu0
  %v2202 = vadd.f32 0.0, %v2201
  %v2203 = vpop.f32.mrf.mxu0
  %v2204 = vpop.f32.mrf.mxu0
  %v2205 = vadd.f32 0.0, %v2204
  %v2206 = vpop.f32.mrf.mxu0
  %2207 = vmatprep.mubr.bf16.mxu0 0
  %2208 = vmatmul.mubr.bf16.gmra.mxu0 %v2144
  %v2209 = vpop.f32.mrf.mxu0
  %v2210 = vadd.f32 0.0, %v2209
  %v2211 = vpop.f32.mrf.mxu0
  %v2212 = vpop.f32.mrf.mxu0
  %v2213 = vadd.f32 0.0, %v2212
  %v2214 = vpop.f32.mrf.mxu0
  %2215 = vmatprep.mubr.bf16.mxu0 0
  %2216 = vmatmul.mubr.bf16.gmra.mxu0 %v2147
  %v2217 = vpop.f32.mrf.mxu0
  %v2218 = vadd.f32 0.0, %v2217
  %v2219 = vpop.f32.mrf.mxu0
  %v2220 = vpop.f32.mrf.mxu0
  %v2221 = vadd.f32 0.0, %v2220
  %v2222 = vpop.f32.mrf.mxu0
  %2223 = vmatprep.mubr.bf16.mxu0 0
  %2224 = vmatmul.mubr.bf16.gmra.mxu0 %v2150
  %v2225 = vpop.f32.mrf.mxu0
  %v2226 = vadd.f32 0.0, %v2225
  %v2227 = vpop.f32.mrf.mxu0
  %v2228 = vpop.f32.mrf.mxu0
  %v2229 = vadd.f32 0.0, %v2228
  %v2230 = vpop.f32.mrf.mxu0
  %2231 = vmatprep.mubr.bf16.mxu0 0
  %2232 = vmatmul.mubr.bf16.gmra.mxu0 %v2153
  %v2233 = vpop.f32.mrf.mxu0
  %v2234 = vadd.f32 0.0, %v2233
  %v2235 = vpop.f32.mrf.mxu0
  %v2236 = vpop.f32.mrf.mxu0
  %v2237 = vadd.f32 0.0, %v2236
  %v2238 = vpop.f32.mrf.mxu0
  %2239 = vmatprep.mubr.bf16.mxu0 0
  %2240 = vmatmul.mubr.bf16.gmra.mxu0 %v2156
  %v2241 = vpop.f32.mrf.mxu0
  %v2242 = vadd.f32 0.0, %v2241
  %v2243 = vpop.f32.mrf.mxu0
  %v2244 = vpop.f32.mrf.mxu0
  %v2245 = vadd.f32 0.0, %v2244
  %v2246 = vpop.f32.mrf.mxu0
  %2247 = vmatprep.mubr.bf16.mxu0 0
  %2248 = vmatmul.mubr.bf16.gmra.mxu0 %v2159
  %v2249 = vpop.f32.mrf.mxu0
  %v2250 = vadd.f32 0.0, %v2249
  %v2251 = vpop.f32.mrf.mxu0
  %v2252 = vpop.f32.mrf.mxu0
  %v2253 = vadd.f32 0.0, %v2252
  %v2254 = vpop.f32.mrf.mxu0
  %2255 = vmatprep.mubr.bf16.mxu0 0
  %2256 = vmatmul.mubr.bf16.gmra.mxu0 %v2162
  %v2257 = vpop.f32.mrf.mxu0
  %v2258 = vadd.f32 0.0, %v2257
  %v2259 = vpop.f32.mrf.mxu0
  %v2260 = vpop.f32.mrf.mxu0
  %v2261 = vadd.f32 0.0, %v2260
  %v2262 = vpop.f32.mrf.mxu0
  %2263 = vdwg.mxu0
  %2264 = vst.msk [vmem:[%s13] sm:$0xff] %vm803, %v2202
  %2265 = vst.msk [vmem:[%s13 + $0x8] sm:$0xff] %vm803, %v2205
  %2266 = vst.msk [vmem:[%s13 + $0x10] sm:$0xff] %vm803, %v2210
  %2267 = vst.msk [vmem:[%s13 + $0x18] sm:$0xff] %vm803, %v2213
  %2268 = vst.msk [vmem:[%s13 + $0x20] sm:$0xff] %vm803, %v2218
  %2269 = vst.msk [vmem:[%s13 + $0x28] sm:$0xff] %vm803, %v2221
  %2270 = vst.msk [vmem:[%s13 + $0x30] sm:$0xff] %vm803, %v2226
  %2271 = vst.msk [vmem:[%s13 + $0x38] sm:$0xff] %vm803, %v2229
  %2272 = vst.msk [vmem:[%s13 + $0x40] sm:$0xff] %vm803, %v2234
  %2273 = vst.msk [vmem:[%s13 + $0x48] sm:$0xff] %vm803, %v2237
  %2274 = vst.msk [vmem:[%s13 + $0x50] sm:$0xff] %vm803, %v2242
  %2275 = vst.msk [vmem:[%s13 + $0x58] sm:$0xff] %vm803, %v2245
  %2276 = vst.msk [vmem:[%s13 + $0x60] sm:$0xff] %vm803, %v2250
  %2277 = vst.msk [vmem:[%s13 + $0x68] sm:$0xff] %vm803, %v2253
  %2278 = vst.msk [vmem:[%s13 + $0x70] sm:$0xff] %vm803, %v2258
  %2279 = vst.msk [vmem:[%s13 + $0x78] sm:$0xff] %vm803, %v2261
  %v2280 = vld [vmem:[%s2] sm:$0xf]
  %v2281 = vld [vmem:[%s2 + $0x4] sm:$0xf]
  %v2282 = vld [vmem:[%s2 + $0x8] sm:$0xf]
  %v2283 = vld [vmem:[%s2 + $0xc] sm:$0xf]
  %s2284 = scalar_lea.vmem %s4, 8
  %v2285 = vld [vmem:[%s2284] sm:$0xf]
  %s2286 = scalar_lea.vmem %s5, 2
  %v2287 = vld [vmem:[%s2286] sm:$0x1]
  %v2289 = vlaneseq
  %v2290 = vshrl.u32 %v2289, 7
  %v2291 = vsub.s32 0, %v2290
  %v2292 = vrot.slane %v2287, %v2291
  %v2298 = vunpack.c.l.b16 %v2280
  %v2299 = vunpack.c.l.b16 %v2281
  %v2300 = vunpack.c.l.b16 %v2282
  %v2301 = vunpack.c.l.b16 %v2283
  %v2302 = vpack.c.b16 %v2299, %v2298
  %v2303 = vpack.c.b16 %v2301, %v2300
  %v2305 = vsel %vm278, %v2302, 0
  %v2308 = vsel %vm278, %v2303, 0
  %v2311 = vsel %vm375, %v2285, 0
  %2313 = vmatprep.subr.bf16.mxu0 0
  %2314 = vmatpush1.bf16.msra.mxu0 0
  %2315 = vmatprep.subr.bf16.mxu0 0
  %2316 = vmatpush1.bf16.msra.mxu0 0
  %2317 = vmatprep.subr.bf16.mxu0 0
  %2318 = vmatpush1.bf16.msra.mxu0 0
  %2319 = vmatprep.subr.bf16.mxu0 0
  %2320 = vmatpush1.bf16.msra.mxu0 0
  %2321 = vmatprep.subr.bf16.mxu0 0
  %2322 = vmatpush1.bf16.msra.mxu0 0
  %2323 = vmatprep.subr.bf16.mxu0 0
  %2324 = vmatpush1.bf16.msra.mxu0 0
  %2325 = vmatprep.subr.bf16.mxu0 0
  %2326 = vmatpush1.bf16.msra.mxu0 0
  %2327 = vmatprep.subr.bf16.mxu0 0
  %2328 = vmatpush1.bf16.msra.mxu0 %v2311
  %2329 = vmatprep.subr.bf16.mxu0 0
  %2330 = vmatpush2.bf16.msra.mxu0 0
  %2331 = vmatprep.subr.bf16.mxu0 0
  %2332 = vmatpush2.bf16.msra.mxu0 0
  %2333 = vmatprep.subr.bf16.mxu0 0
  %2334 = vmatpush2.bf16.msra.mxu0 0
  %2335 = vmatprep.subr.bf16.mxu0 0
  %2336 = vmatpush2.bf16.msra.mxu0 0
  %2337 = vmatprep.subr.bf16.mxu0 0
  %2338 = vmatpush2.bf16.msra.mxu0 0
  %2339 = vmatprep.subr.bf16.mxu0 0
  %2340 = vmatpush2.bf16.msra.mxu0 0
  %2341 = vmatprep.subr.bf16.mxu0 0
  %2342 = vmatpush2.bf16.msra.mxu0 0
  %2343 = vmatprep.subr.bf16.mxu0 0
  %2344 = vmatpush2.bf16.msra.mxu0 0
  %2345 = vmatprep.mubr.bf16.mxu0 0
  %2346 = vmatmul.mubr.bf16.gmra.mxu0 %v2305
  %v2347 = vpop.f32.mrf.mxu0
  %v2348 = vadd.f32 %v2292, %v2347
  %v2349 = vpop.f32.mrf.mxu0
  %v2350 = vpop.f32.mrf.mxu0
  %v2351 = vadd.f32 %v2292, %v2350
  %v2352 = vpop.f32.mrf.mxu0
  %2353 = vmatprep.mubr.bf16.mxu0 0
  %2354 = vmatmul.mubr.bf16.gmra.mxu0 %v2308
  %v2355 = vpop.f32.mrf.mxu0
  %v2356 = vadd.f32 %v2292, %v2355
  %v2357 = vpop.f32.mrf.mxu0
  %v2358 = vpop.f32.mrf.mxu0
  %v2359 = vadd.f32 %v2292, %v2358
  %v2360 = vpop.f32.mrf.mxu0
  %2361 = vdwg.mxu0
  %v2362 = vmax.f32 %v2348, 0.0
  %v2363 = vmax.f32 %v2351, 0.0
  %v2364 = vmax.f32 %v2356, 0.0
  %v2365 = vmax.f32 %v2359, 0.0
  %v2366 = vpack.c.bf16 %v2363, %v2362
  %v2367 = vpack.c.bf16 %v2365, %v2364
  %s2368 = scalar_lea.vmem %s6, 64
  %v2369 = vld [vmem:[%s2368] sm:$0xf]
  %v2370 = vld [vmem:[%s2368 + $0x4] sm:$0xf]
  %v2371 = vld [vmem:[%s2368 + $0x8] sm:$0xf]
  %v2372 = vld [vmem:[%s2368 + $0xc] sm:$0xf]
  %v2373 = vld [vmem:[%s2368 + $0x10] sm:$0xf]
  %v2374 = vld [vmem:[%s2368 + $0x14] sm:$0xf]
  %v2375 = vld [vmem:[%s2368 + $0x18] sm:$0xf]
  %v2376 = vld [vmem:[%s2368 + $0x1c] sm:$0xf]
  %s2377 = scalar_lea.vmem %s7, 2
  %v2378 = vld [vmem:[%s2377] sm:$0x1]
  %v2380 = vlaneseq
  %v2381 = vshrl.u32 %v2380, 7
  %v2382 = vsub.s32 0, %v2381
  %v2383 = vrot.slane %v2378, %v2382
  %v2393 = vunpack.c.l.b16 %v2369
  %v2394 = vunpack.c.l.b16 %v2370
  %v2395 = vunpack.c.l.b16 %v2371
  %v2396 = vunpack.c.l.b16 %v2372
  %v2397 = vunpack.c.l.b16 %v2373
  %v2398 = vunpack.c.l.b16 %v2374
  %v2399 = vunpack.c.l.b16 %v2375
  %v2400 = vunpack.c.l.b16 %v2376
  %v2401 = vpack.c.b16 %v2394, %v2393
  %v2402 = vpack.c.b16 %v2396, %v2395
  %v2403 = vpack.c.b16 %v2398, %v2397
  %v2404 = vpack.c.b16 %v2400, %v2399
  %v2410 = vsel %vm803, %v2366, 0
  %v2413 = vsel %vm803, %v2367, 0
  %2415 = vmatprep.subr.bf16.mxu0 0
  %2416 = vmatpush1.bf16.msra.mxu0 0
  %2417 = vmatprep.subr.bf16.mxu0 0
  %2418 = vmatpush1.bf16.msra.mxu0 0
  %2419 = vmatprep.subr.bf16.mxu0 0
  %2420 = vmatpush1.bf16.msra.mxu0 0
  %2421 = vmatprep.subr.bf16.mxu0 0
  %2422 = vmatpush1.bf16.msra.mxu0 0
  %2423 = vmatprep.subr.bf16.mxu0 0
  %2424 = vmatpush1.bf16.msra.mxu0 %v2404
  %2425 = vmatprep.subr.bf16.mxu0 0
  %2426 = vmatpush1.bf16.msra.mxu0 %v2403
  %2427 = vmatprep.subr.bf16.mxu0 0
  %2428 = vmatpush1.bf16.msra.mxu0 %v2402
  %2429 = vmatprep.subr.bf16.mxu0 0
  %2430 = vmatpush1.bf16.msra.mxu0 %v2401
  %2431 = vmatprep.subr.bf16.mxu0 0
  %2432 = vmatpush2.bf16.msra.mxu0 0
  %2433 = vmatprep.subr.bf16.mxu0 0
  %2434 = vmatpush2.bf16.msra.mxu0 0
  %2435 = vmatprep.subr.bf16.mxu0 0
  %2436 = vmatpush2.bf16.msra.mxu0 0
  %2437 = vmatprep.subr.bf16.mxu0 0
  %2438 = vmatpush2.bf16.msra.mxu0 0
  %2439 = vmatprep.subr.bf16.mxu0 0
  %2440 = vmatpush2.bf16.msra.mxu0 0
  %2441 = vmatprep.subr.bf16.mxu0 0
  %2442 = vmatpush2.bf16.msra.mxu0 0
  %2443 = vmatprep.subr.bf16.mxu0 0
  %2444 = vmatpush2.bf16.msra.mxu0 0
  %2445 = vmatprep.subr.bf16.mxu0 0
  %2446 = vmatpush2.bf16.msra.mxu0 0
  %2447 = vmatprep.mubr.bf16.mxu0 0
  %2448 = vmatmul.mubr.bf16.gmra.mxu0 %v2410
  %v2449 = vpop.f32.mrf.mxu0
  %v2450 = vadd.f32 %v2383, %v2449
  %v2451 = vpop.f32.mrf.mxu0
  %v2452 = vpop.f32.mrf.mxu0
  %v2453 = vadd.f32 %v2383, %v2452
  %v2454 = vpop.f32.mrf.mxu0
  %2455 = vmatprep.mubr.bf16.mxu0 0
  %2456 = vmatmul.mubr.bf16.gmra.mxu0 %v2413
  %v2457 = vpop.f32.mrf.mxu0
  %v2458 = vadd.f32 %v2383, %v2457
  %v2459 = vpop.f32.mrf.mxu0
  %v2460 = vpop.f32.mrf.mxu0
  %v2461 = vadd.f32 %v2383, %v2460
  %v2462 = vpop.f32.mrf.mxu0
  %2463 = vdwg.mxu0
  %v2464 = vmax.f32 %v2450, 0.0
  %v2465 = vmax.f32 %v2453, 0.0
  %v2466 = vmax.f32 %v2458, 0.0
  %v2467 = vmax.f32 %v2461, 0.0
  %v2468 = vpack.c.bf16 %v2465, %v2464
  %v2469 = vpack.c.bf16 %v2467, %v2466
  %v2470 = vld [vmem:[%s10] sm:$0xff]
  %v2472 = vunpack.c.l.b16 %v2470
  %v2473 = vunpack.c.h.b16 %v2470
  %v2474 = vpack.c.b16 %v2472, %v2472
  %v2475 = vpack.c.b16 %v2473, %v2473
  %v2477 = vsel %vm278, %v2468, 0
  %v2480 = vsel %vm278, %v2469, 0
  %v2483 = vsel %vm375, %v2474, 0
  %v2486 = vsel %vm375, %v2475, 0
  %2488 = vmatprep.subr.bf16.mxu0 0
  %2489 = vmatpush1.bf16.msra.mxu0 0
  %2490 = vmatprep.subr.bf16.mxu0 0
  %2491 = vmatpush1.bf16.msra.mxu0 0
  %2492 = vmatprep.subr.bf16.mxu0 0
  %2493 = vmatpush1.bf16.msra.mxu0 0
  %2494 = vmatprep.subr.bf16.mxu0 0
  %2495 = vmatpush1.bf16.msra.mxu0 0
  %2496 = vmatprep.subr.bf16.mxu0 0
  %2497 = vmatpush1.bf16.msra.mxu0 0
  %2498 = vmatprep.subr.bf16.mxu0 0
  %2499 = vmatpush1.bf16.msra.mxu0 0
  %2500 = vmatprep.subr.bf16.mxu0 0
  %2501 = vmatpush1.bf16.msra.mxu0 0
  %2502 = vmatprep.subr.bf16.mxu0 %v2486
  %2503 = vmatpush1.bf16.msra.mxu0 %v2483
  %2504 = vmatprep.subr.bf16.mxu0 0
  %2505 = vmatpush2.bf16.msra.mxu0 0
  %2506 = vmatprep.subr.bf16.mxu0 0
  %2507 = vmatpush2.bf16.msra.mxu0 0
  %2508 = vmatprep.subr.bf16.mxu0 0
  %2509 = vmatpush2.bf16.msra.mxu0 0
  %2510 = vmatprep.subr.bf16.mxu0 0
  %2511 = vmatpush2.bf16.msra.mxu0 0
  %2512 = vmatprep.subr.bf16.mxu0 0
  %2513 = vmatpush2.bf16.msra.mxu0 0
  %2514 = vmatprep.subr.bf16.mxu0 0
  %2515 = vmatpush2.bf16.msra.mxu0 0
  %2516 = vmatprep.subr.bf16.mxu0 0
  %2517 = vmatpush2.bf16.msra.mxu0 0
  %2518 = vmatprep.subr.bf16.mxu0 0
  %2519 = vmatpush2.bf16.msra.mxu0 0
  %2520 = vmatprep.mubr.bf16.mxu0 0
  %2521 = vmatmul.mubr.bf16.gmra.mxu0 %v2477
  %v2522 = vpop.f32.mrf.mxu0
  %v2523 = vadd.f32 0.0, %v2522
  %v2524 = vpop.f32.mrf.mxu0
  %v2525 = vadd.f32 0.0, %v2524
  %v2526 = vpop.f32.mrf.mxu0
  %v2527 = vadd.f32 0.0, %v2526
  %v2528 = vpop.f32.mrf.mxu0
  %v2529 = vadd.f32 0.0, %v2528
  %2530 = vmatprep.mubr.bf16.mxu0 0
  %2531 = vmatmul.mubr.bf16.gmra.mxu0 %v2480
  %v2532 = vpop.f32.mrf.mxu0
  %v2533 = vadd.f32 0.0, %v2532
  %v2534 = vpop.f32.mrf.mxu0
  %v2535 = vadd.f32 0.0, %v2534
  %v2536 = vpop.f32.mrf.mxu0
  %v2537 = vadd.f32 0.0, %v2536
  %v2538 = vpop.f32.mrf.mxu0
  %v2539 = vadd.f32 0.0, %v2538
  %2540 = vdwg.mxu0
  %2541 = vst [vmem:[%s14] sm:$0xff] %v2523
  %2542 = vst [vmem:[%s14 + $0x8] sm:$0xff] %v2525
  %2543 = vst [vmem:[%s14 + $0x10] sm:$0xff] %v2527
  %2544 = vst [vmem:[%s14 + $0x18] sm:$0xff] %v2529
  %2545 = vst [vmem:[%s14 + $0x20] sm:$0xff] %v2533
  %2546 = vst [vmem:[%s14 + $0x28] sm:$0xff] %v2535
  %2547 = vst [vmem:[%s14 + $0x30] sm:$0xff] %v2537
  %2548 = vst [vmem:[%s14 + $0x38] sm:$0xff] %v2539
  %v2549 = vld [vmem:[%s3] sm:$0xf]
  %s2550 = scalar_lea.vmem %s4, 12
  %v2551 = vld [vmem:[%s2550] sm:$0xf]
  %s2552 = scalar_lea.vmem %s5, 3
  %v2553 = vld [vmem:[%s2552] sm:$0x1]
  %v2555 = vlaneseq
  %v2556 = vshrl.u32 %v2555, 7
  %v2557 = vsub.s32 0, %v2556
  %v2558 = vrot.slane %v2553, %v2557
  %v2561 = vsel %vm278, %v2549, 0
  %v2564 = vsel %vm375, %v2551, 0
  %2566 = vmatprep.subr.bf16.mxu0 0
  %2567 = vmatpush1.bf16.msra.mxu0 0
  %2568 = vmatprep.subr.bf16.mxu0 0
  %2569 = vmatpush1.bf16.msra.mxu0 0
  %2570 = vmatprep.subr.bf16.mxu0 0
  %2571 = vmatpush1.bf16.msra.mxu0 0
  %2572 = vmatprep.subr.bf16.mxu0 0
  %2573 = vmatpush1.bf16.msra.mxu0 0
  %2574 = vmatprep.subr.bf16.mxu0 0
  %2575 = vmatpush1.bf16.msra.mxu0 0
  %2576 = vmatprep.subr.bf16.mxu0 0
  %2577 = vmatpush1.bf16.msra.mxu0 0
  %2578 = vmatprep.subr.bf16.mxu0 0
  %2579 = vmatpush1.bf16.msra.mxu0 0
  %2580 = vmatprep.subr.bf16.mxu0 0
  %2581 = vmatpush1.bf16.msra.mxu0 %v2564
  %2582 = vmatprep.subr.bf16.mxu0 0
  %2583 = vmatpush2.bf16.msra.mxu0 0
  %2584 = vmatprep.subr.bf16.mxu0 0
  %2585 = vmatpush2.bf16.msra.mxu0 0
  %2586 = vmatprep.subr.bf16.mxu0 0
  %2587 = vmatpush2.bf16.msra.mxu0 0
  %2588 = vmatprep.subr.bf16.mxu0 0
  %2589 = vmatpush2.bf16.msra.mxu0 0
  %2590 = vmatprep.subr.bf16.mxu0 0
  %2591 = vmatpush2.bf16.msra.mxu0 0
  %2592 = vmatprep.subr.bf16.mxu0 0
  %2593 = vmatpush2.bf16.msra.mxu0 0
  %2594 = vmatprep.subr.bf16.mxu0 0
  %2595 = vmatpush2.bf16.msra.mxu0 0
  %2596 = vmatprep.subr.bf16.mxu0 0
  %2597 = vmatpush2.bf16.msra.mxu0 0
  %2598 = vmatprep.mubr.bf16.mxu0 0
  %2599 = vmatmul.mubr.bf16.gmra.mxu0 %v2561
  %v2600 = vpop.f32.mrf.mxu0
  %v2601 = vadd.f32 %v2558, %v2600
  %v2602 = vpop.f32.mrf.mxu0
  %v2603 = vpop.f32.mrf.mxu0
  %v2604 = vpop.f32.mrf.mxu0
  %2605 = vdwg.mxu0
  %v2606 = vmax.f32 %v2601, 0.0
  %v2607 = vpack.c.bf16 %v2606, %v2606
  %s2608 = scalar_lea.vmem %s6, 96
  %v2609 = vld [vmem:[%s2608] sm:$0xf]
  %v2610 = vld [vmem:[%s2608 + $0x4] sm:$0xf]
  %v2611 = vld [vmem:[%s2608 + $0x8] sm:$0xf]
  %v2612 = vld [vmem:[%s2608 + $0xc] sm:$0xf]
  %v2613 = vld [vmem:[%s2608 + $0x10] sm:$0xf]
  %v2614 = vld [vmem:[%s2608 + $0x14] sm:$0xf]
  %v2615 = vld [vmem:[%s2608 + $0x18] sm:$0xf]
  %v2616 = vld [vmem:[%s2608 + $0x1c] sm:$0xf]
  %s2617 = scalar_lea.vmem %s7, 3
  %v2618 = vld [vmem:[%s2617] sm:$0x1]
  %v2620 = vlaneseq
  %v2621 = vshrl.u32 %v2620, 7
  %v2622 = vsub.s32 0, %v2621
  %v2623 = vrot.slane %v2618, %v2622
  %v2633 = vunpack.c.l.b16 %v2609
  %v2634 = vunpack.c.l.b16 %v2610
  %v2635 = vunpack.c.l.b16 %v2611
  %v2636 = vunpack.c.l.b16 %v2612
  %v2637 = vunpack.c.l.b16 %v2613
  %v2638 = vunpack.c.l.b16 %v2614
  %v2639 = vunpack.c.l.b16 %v2615
  %v2640 = vunpack.c.l.b16 %v2616
  %v2641 = vpack.c.b16 %v2634, %v2633
  %v2642 = vpack.c.b16 %v2636, %v2635
  %v2643 = vpack.c.b16 %v2638, %v2637
  %v2644 = vpack.c.b16 %v2640, %v2639
  %v2650 = vsel %vm803, %v2607, 0
  %2652 = vmatprep.subr.bf16.mxu0 0
  %2653 = vmatpush1.bf16.msra.mxu0 0
  %2654 = vmatprep.subr.bf16.mxu0 0
  %2655 = vmatpush1.bf16.msra.mxu0 0
  %2656 = vmatprep.subr.bf16.mxu0 0
  %2657 = vmatpush1.bf16.msra.mxu0 0
  %2658 = vmatprep.subr.bf16.mxu0 0
  %2659 = vmatpush1.bf16.msra.mxu0 0
  %2660 = vmatprep.subr.bf16.mxu0 0
  %2661 = vmatpush1.bf16.msra.mxu0 %v2644
  %2662 = vmatprep.subr.bf16.mxu0 0
  %2663 = vmatpush1.bf16.msra.mxu0 %v2643
  %2664 = vmatprep.subr.bf16.mxu0 0
  %2665 = vmatpush1.bf16.msra.mxu0 %v2642
  %2666 = vmatprep.subr.bf16.mxu0 0
  %2667 = vmatpush1.bf16.msra.mxu0 %v2641
  %2668 = vmatprep.subr.bf16.mxu0 0
  %2669 = vmatpush2.bf16.msra.mxu0 0
  %2670 = vmatprep.subr.bf16.mxu0 0
  %2671 = vmatpush2.bf16.msra.mxu0 0
  %2672 = vmatprep.subr.bf16.mxu0 0
  %2673 = vmatpush2.bf16.msra.mxu0 0
  %2674 = vmatprep.subr.bf16.mxu0 0
  %2675 = vmatpush2.bf16.msra.mxu0 0
  %2676 = vmatprep.subr.bf16.mxu0 0
  %2677 = vmatpush2.bf16.msra.mxu0 0
  %2678 = vmatprep.subr.bf16.mxu0 0
  %2679 = vmatpush2.bf16.msra.mxu0 0
  %2680 = vmatprep.subr.bf16.mxu0 0
  %2681 = vmatpush2.bf16.msra.mxu0 0
  %2682 = vmatprep.subr.bf16.mxu0 0
  %2683 = vmatpush2.bf16.msra.mxu0 0
  %2684 = vmatprep.mubr.bf16.mxu0 0
  %2685 = vmatmul.mubr.bf16.gmra.mxu0 %v2650
  %v2686 = vpop.f32.mrf.mxu0
  %v2687 = vadd.f32 %v2623, %v2686
  %v2688 = vpop.f32.mrf.mxu0
  %v2689 = vpop.f32.mrf.mxu0
  %v2690 = vpop.f32.mrf.mxu0
  %2691 = vdwg.mxu0
  %v2692 = vmax.f32 %v2687, 0.0
  %v2693 = vpack.c.bf16 %v2692, %v2692
  %v2694 = vld [vmem:[%s11] sm:$0xff]
  %v2695 = vld [vmem:[%s11 + $0x8] sm:$0xff]
  %v2696 = vld [vmem:[%s11 + $0x10] sm:$0xff]
  %v2697 = vld [vmem:[%s11 + $0x18] sm:$0xff]
  %v2702 = vunpack.c.l.b16 %v2694
  %v2703 = vunpack.c.h.b16 %v2694
  %v2704 = vunpack.c.l.b16 %v2695
  %v2705 = vunpack.c.h.b16 %v2695
  %v2706 = vunpack.c.l.b16 %v2696
  %v2707 = vunpack.c.h.b16 %v2696
  %v2708 = vunpack.c.l.b16 %v2697
  %v2709 = vunpack.c.h.b16 %v2697
  %v2710 = vpack.c.b16 %v2702, %v2702
  %v2711 = vpack.c.b16 %v2703, %v2703
  %v2712 = vpack.c.b16 %v2704, %v2704
  %v2713 = vpack.c.b16 %v2705, %v2705
  %v2714 = vpack.c.b16 %v2706, %v2706
  %v2715 = vpack.c.b16 %v2707, %v2707
  %v2716 = vpack.c.b16 %v2708, %v2708
  %v2717 = vpack.c.b16 %v2709, %v2709
  %v2719 = vsel %vm278, %v2693, 0
  %v2722 = vsel %vm375, %v2710, 0
  %v2725 = vsel %vm375, %v2711, 0
  %v2728 = vsel %vm375, %v2712, 0
  %v2731 = vsel %vm375, %v2713, 0
  %v2734 = vsel %vm375, %v2714, 0
  %v2737 = vsel %vm375, %v2715, 0
  %v2740 = vsel %vm375, %v2716, 0
  %v2743 = vsel %vm375, %v2717, 0
  %2745 = vmatprep.subr.bf16.mxu0 0
  %2746 = vmatpush1.bf16.msra.mxu0 0
  %2747 = vmatprep.subr.bf16.mxu0 0
  %2748 = vmatpush1.bf16.msra.mxu0 0
  %2749 = vmatprep.subr.bf16.mxu0 0
  %2750 = vmatpush1.bf16.msra.mxu0 0
  %2751 = vmatprep.subr.bf16.mxu0 0
  %2752 = vmatpush1.bf16.msra.mxu0 0
  %2753 = vmatprep.subr.bf16.mxu0 0
  %2754 = vmatpush1.bf16.msra.mxu0 0
  %2755 = vmatprep.subr.bf16.mxu0 0
  %2756 = vmatpush1.bf16.msra.mxu0 0
  %2757 = vmatprep.subr.bf16.mxu0 0
  %2758 = vmatpush1.bf16.msra.mxu0 0
  %2759 = vmatprep.subr.bf16.mxu0 %v2725
  %2760 = vmatpush1.bf16.msra.mxu0 %v2722
  %2761 = vmatprep.subr.bf16.mxu0 0
  %2762 = vmatpush2.bf16.msra.mxu0 0
  %2763 = vmatprep.subr.bf16.mxu0 0
  %2764 = vmatpush2.bf16.msra.mxu0 0
  %2765 = vmatprep.subr.bf16.mxu0 0
  %2766 = vmatpush2.bf16.msra.mxu0 0
  %2767 = vmatprep.subr.bf16.mxu0 0
  %2768 = vmatpush2.bf16.msra.mxu0 0
  %2769 = vmatprep.subr.bf16.mxu0 0
  %2770 = vmatpush2.bf16.msra.mxu0 0
  %2771 = vmatprep.subr.bf16.mxu0 0
  %2772 = vmatpush2.bf16.msra.mxu0 0
  %2773 = vmatprep.subr.bf16.mxu0 0
  %2774 = vmatpush2.bf16.msra.mxu0 0
  %2775 = vmatprep.subr.bf16.mxu0 0
  %2776 = vmatpush2.bf16.msra.mxu0 0
  %2777 = vmatprep.mubr.bf16.mxu0 0
  %2778 = vmatmul.mubr.bf16.gmra.mxu0 %v2719
  %v2779 = vpop.f32.mrf.mxu0
  %v2780 = vadd.f32 0.0, %v2779
  %v2781 = vpop.f32.mrf.mxu0
  %v2782 = vadd.f32 0.0, %v2781
  %v2783 = vpop.f32.mrf.mxu0
  %v2784 = vpop.f32.mrf.mxu0
  %2785 = vdwg.mxu0
  %2786 = vmatprep.subr.bf16.mxu0 0
  %2787 = vmatpush1.bf16.msra.mxu0 0
  %2788 = vmatprep.subr.bf16.mxu0 0
  %2789 = vmatpush1.bf16.msra.mxu0 0
  %2790 = vmatprep.subr.bf16.mxu0 0
  %2791 = vmatpush1.bf16.msra.mxu0 0
  %2792 = vmatprep.subr.bf16.mxu0 0
  %2793 = vmatpush1.bf16.msra.mxu0 0
  %2794 = vmatprep.subr.bf16.mxu0 0
  %2795 = vmatpush1.bf16.msra.mxu0 0
  %2796 = vmatprep.subr.bf16.mxu0 0
  %2797 = vmatpush1.bf16.msra.mxu0 0
  %2798 = vmatprep.subr.bf16.mxu0 0
  %2799 = vmatpush1.bf16.msra.mxu0 0
  %2800 = vmatprep.subr.bf16.mxu0 %v2731
  %2801 = vmatpush1.bf16.msra.mxu0 %v2728
  %2802 = vmatprep.subr.bf16.mxu0 0
  %2803 = vmatpush2.bf16.msra.mxu0 0
  %2804 = vmatprep.subr.bf16.mxu0 0
  %2805 = vmatpush2.bf16.msra.mxu0 0
  %2806 = vmatprep.subr.bf16.mxu0 0
  %2807 = vmatpush2.bf16.msra.mxu0 0
  %2808 = vmatprep.subr.bf16.mxu0 0
  %2809 = vmatpush2.bf16.msra.mxu0 0
  %2810 = vmatprep.subr.bf16.mxu0 0
  %2811 = vmatpush2.bf16.msra.mxu0 0
  %2812 = vmatprep.subr.bf16.mxu0 0
  %2813 = vmatpush2.bf16.msra.mxu0 0
  %2814 = vmatprep.subr.bf16.mxu0 0
  %2815 = vmatpush2.bf16.msra.mxu0 0
  %2816 = vmatprep.subr.bf16.mxu0 0
  %2817 = vmatpush2.bf16.msra.mxu0 0
  %2818 = vmatprep.mubr.bf16.mxu0 0
  %2819 = vmatmul.mubr.bf16.gmra.mxu0 %v2719
  %v2820 = vpop.f32.mrf.mxu0
  %v2821 = vadd.f32 0.0, %v2820
  %v2822 = vpop.f32.mrf.mxu0
  %v2823 = vadd.f32 0.0, %v2822
  %v2824 = vpop.f32.mrf.mxu0
  %v2825 = vpop.f32.mrf.mxu0
  %2826 = vdwg.mxu0
  %2827 = vmatprep.subr.bf16.mxu0 0
  %2828 = vmatpush1.bf16.msra.mxu0 0
  %2829 = vmatprep.subr.bf16.mxu0 0
  %2830 = vmatpush1.bf16.msra.mxu0 0
  %2831 = vmatprep.subr.bf16.mxu0 0
  %2832 = vmatpush1.bf16.msra.mxu0 0
  %2833 = vmatprep.subr.bf16.mxu0 0
  %2834 = vmatpush1.bf16.msra.mxu0 0
  %2835 = vmatprep.subr.bf16.mxu0 0
  %2836 = vmatpush1.bf16.msra.mxu0 0
  %2837 = vmatprep.subr.bf16.mxu0 0
  %2838 = vmatpush1.bf16.msra.mxu0 0
  %2839 = vmatprep.subr.bf16.mxu0 0
  %2840 = vmatpush1.bf16.msra.mxu0 0
  %2841 = vmatprep.subr.bf16.mxu0 %v2737
  %2842 = vmatpush1.bf16.msra.mxu0 %v2734
  %2843 = vmatprep.subr.bf16.mxu0 0
  %2844 = vmatpush2.bf16.msra.mxu0 0
  %2845 = vmatprep.subr.bf16.mxu0 0
  %2846 = vmatpush2.bf16.msra.mxu0 0
  %2847 = vmatprep.subr.bf16.mxu0 0
  %2848 = vmatpush2.bf16.msra.mxu0 0
  %2849 = vmatprep.subr.bf16.mxu0 0
  %2850 = vmatpush2.bf16.msra.mxu0 0
  %2851 = vmatprep.subr.bf16.mxu0 0
  %2852 = vmatpush2.bf16.msra.mxu0 0
  %2853 = vmatprep.subr.bf16.mxu0 0
  %2854 = vmatpush2.bf16.msra.mxu0 0
  %2855 = vmatprep.subr.bf16.mxu0 0
  %2856 = vmatpush2.bf16.msra.mxu0 0
  %2857 = vmatprep.subr.bf16.mxu0 0
  %2858 = vmatpush2.bf16.msra.mxu0 0
  %2859 = vmatprep.mubr.bf16.mxu0 0
  %2860 = vmatmul.mubr.bf16.gmra.mxu0 %v2719
  %v2861 = vpop.f32.mrf.mxu0
  %v2862 = vadd.f32 0.0, %v2861
  %v2863 = vpop.f32.mrf.mxu0
  %v2864 = vadd.f32 0.0, %v2863
  %v2865 = vpop.f32.mrf.mxu0
  %v2866 = vpop.f32.mrf.mxu0
  %2867 = vdwg.mxu0
  %2868 = vmatprep.subr.bf16.mxu0 0
  %2869 = vmatpush1.bf16.msra.mxu0 0
  %2870 = vmatprep.subr.bf16.mxu0 0
  %2871 = vmatpush1.bf16.msra.mxu0 0
  %2872 = vmatprep.subr.bf16.mxu0 0
  %2873 = vmatpush1.bf16.msra.mxu0 0
  %2874 = vmatprep.subr.bf16.mxu0 0
  %2875 = vmatpush1.bf16.msra.mxu0 0
  %2876 = vmatprep.subr.bf16.mxu0 0
  %2877 = vmatpush1.bf16.msra.mxu0 0
  %2878 = vmatprep.subr.bf16.mxu0 0
  %2879 = vmatpush1.bf16.msra.mxu0 0
  %2880 = vmatprep.subr.bf16.mxu0 0
  %2881 = vmatpush1.bf16.msra.mxu0 0
  %2882 = vmatprep.subr.bf16.mxu0 %v2743
  %2883 = vmatpush1.bf16.msra.mxu0 %v2740
  %2884 = vmatprep.subr.bf16.mxu0 0
  %2885 = vmatpush2.bf16.msra.mxu0 0
  %2886 = vmatprep.subr.bf16.mxu0 0
  %2887 = vmatpush2.bf16.msra.mxu0 0
  %2888 = vmatprep.subr.bf16.mxu0 0
  %2889 = vmatpush2.bf16.msra.mxu0 0
  %2890 = vmatprep.subr.bf16.mxu0 0
  %2891 = vmatpush2.bf16.msra.mxu0 0
  %2892 = vmatprep.subr.bf16.mxu0 0
  %2893 = vmatpush2.bf16.msra.mxu0 0
  %2894 = vmatprep.subr.bf16.mxu0 0
  %2895 = vmatpush2.bf16.msra.mxu0 0
  %2896 = vmatprep.subr.bf16.mxu0 0
  %2897 = vmatpush2.bf16.msra.mxu0 0
  %2898 = vmatprep.subr.bf16.mxu0 0
  %2899 = vmatpush2.bf16.msra.mxu0 0
  %2900 = vmatprep.mubr.bf16.mxu0 0
  %2901 = vmatmul.mubr.bf16.gmra.mxu0 %v2719
  %v2902 = vpop.f32.mrf.mxu0
  %v2903 = vadd.f32 0.0, %v2902
  %v2904 = vpop.f32.mrf.mxu0
  %v2905 = vadd.f32 0.0, %v2904
  %v2906 = vpop.f32.mrf.mxu0
  %v2907 = vpop.f32.mrf.mxu0
  %2908 = vdwg.mxu0
  %2909 = vst [vmem:[%s15] sm:$0xff] %v2780
  %2910 = vst [vmem:[%s15 + $0x8] sm:$0xff] %v2782
  %2911 = vst [vmem:[%s15 + $0x10] sm:$0xff] %v2821
  %2912 = vst [vmem:[%s15 + $0x18] sm:$0xff] %v2823
  %2913 = vst [vmem:[%s15 + $0x20] sm:$0xff] %v2862
  %2914 = vst [vmem:[%s15 + $0x28] sm:$0xff] %v2864
  %2915 = vst [vmem:[%s15 + $0x30] sm:$0xff] %v2903
  %2916 = vst [vmem:[%s15 + $0x38] sm:$0xff] %v2905
  // Predicated region
  $region50: #{rgbd_incomplete_forward.1} parent=0 // pred_check
    _
  $region51: #{rgbd_incomplete_forward.1} parent=0 // pred_check_branch
    %2918 = sbr.rel (0) target = $region53
  $region52: #{rgbd_incomplete_forward.1} parent=0 // pred_region
    _
  $region53: #{rgbd_incomplete_forward.1} parent=0 // pred_fallthru
    _
  // Predicated region
  $region54: #{rgbd_incomplete_forward.1} parent=0 // pred_check
    _
  $region55: #{rgbd_incomplete_forward.1} parent=0 // pred_check_branch
    %2920 = sbr.rel (0) target = $region57
  $region56: #{rgbd_incomplete_forward.1} parent=0 // pred_region
    _
  $region57: #{rgbd_incomplete_forward.1} parent=0 // pred_fallthru
    _
  // Predicated region
  $region58: #{rgbd_incomplete_forward.1} parent=0 // pred_check
    _
  $region59: #{rgbd_incomplete_forward.1} parent=0 // pred_check_branch
    %2922 = sbr.rel (0) target = $region61
  $region60: #{rgbd_incomplete_forward.1} parent=0 // pred_region
    _
  $region61: #{rgbd_incomplete_forward.1} parent=0 // pred_fallthru
    _
  // Predicated region
  $region62: #{rgbd_incomplete_forward.1} parent=0 // pred_check
    _
  $region63: #{rgbd_incomplete_forward.1} parent=0 // pred_check_branch
    %2924 = sbr.rel (0) target = $region65
  $region64: #{rgbd_incomplete_forward.1} parent=0 // pred_region
    _
  $region65: #{rgbd_incomplete_forward.1} parent=0 // pred_fallthru
    _
  // Predicated region
  $region66: #{rgbd_incomplete_forward.1} parent=0 // pred_check
    _
  $region67: #{rgbd_incomplete_forward.1} parent=0 // pred_check_branch
    %2926 = sbr.rel (0) target = $region69
  $region68: #{rgbd_incomplete_forward.1} parent=0 // pred_region
    _
  $region69: #{rgbd_incomplete_forward.1} parent=0 // pred_fallthru
    _
  // Predicated region
  $region70: #{rgbd_incomplete_forward.1} parent=0 // pred_check
    _
  $region71: #{rgbd_incomplete_forward.1} parent=0 // pred_check_branch
    %2928 = sbr.rel (0) target = $region73
  $region72: #{rgbd_incomplete_forward.1} parent=0 // pred_region
    _
  $region73: #{rgbd_incomplete_forward.1} parent=0 // pred_fallthru
    _
  // Predicated region
  $region74: #{rgbd_incomplete_forward.1} parent=0 // pred_check
    _
  $region75: #{rgbd_incomplete_forward.1} parent=0 // pred_check_branch
    %2930 = sbr.rel (0) target = $region77
  $region76: #{rgbd_incomplete_forward.1} parent=0 // pred_region
    _
  $region77: #{rgbd_incomplete_forward.1} parent=0 // pred_fallthru
    _
  // Predicated region
  $region78: #{rgbd_incomplete_forward.1} parent=0 // pred_check
    _
  $region79: #{rgbd_incomplete_forward.1} parent=0 // pred_check_branch
    %2932 = sbr.rel (0) target = $region81
  $region80: #{rgbd_incomplete_forward.1} parent=0 // pred_region
    _
  $region81: #{rgbd_incomplete_forward.1} parent=0 // pred_fallthru
    _

</llo_original>
